<compile_context>
chip_gen: v7x
topology: tpu7x:2x2x1
jax: 0.10.0
libtpu: 0.0.40
codegen_flags: <defaults>
</compile_context>

<pallas_src>
import math

import jax
import jax.numpy as jnp
from jax.experimental import pallas as pl
from jax.experimental.pallas import tpu as pltpu


def gru_predictor_kernel(x_ref, p_ref, out_ref):
    """Fused GRU (input_features == 1) + Linear forward.

    x_ref:   (B, T)            input sequences, one feature per timestep
    p_ref:   (H + 4 + O, 3H)   packed parameter slab (see pack_params)
    out_ref: (B, O)
    """
    B, T = x_ref.shape
    H = p_ref.shape[1] // 3
    O = out_ref.shape[1]
    H2 = 2 * H

    # ---- Unpack the parameter slab (static slices; the only data movement
    #      is the one-time lane re-alignment of the n-gate columns). --------
    wh_rz = p_ref[:H, :H2]                    # (H, 2H)  [W_hr^T | W_hz^T]
    wh_n = p_ref[:H, H2:]                     # (H, H)   W_hn^T
    wi_rz = p_ref[H:H + 1, :H2]               # (1, 2H)  [w_ir | w_iz]   (F == 1)
    wi_n = p_ref[H:H + 1, H2:]                # (1, H)   w_in
    bi_rz = p_ref[H + 1:H + 2, :H2]           # (1, 2H)  [b_ir+b_hr | b_iz+b_hz]
    bi_n = p_ref[H + 1:H + 2, H2:]            # (1, H)   b_in
    bhn = p_ref[H + 2:H + 3, :H]              # (1, H)   b_hn (stays inside r*(.))
    wfc = p_ref[H + 3:H + 3 + O, :H]          # (O, H)   final linear weight
    bfc = p_ref[H + 3 + O:H + 4 + O, :O]      # (1, O)   final linear bias

    bhn_b = jnp.broadcast_to(bhn, (B, H))     # hoisted broadcast (not per-step)

    # ---- Hoisted input projections for ALL timesteps. F == 1, so each step
    #      is a lane-broadcast + FMA; none of this is on the serial chain,
    #      and each per-step slab is sublane-0 / lane-0 aligned. ------------
    x_bt = x_ref[...]                         # (B, T), read once
    xp_rz = []
    xp_n = []
    for t in range(T):
        x_t = x_bt[:, t:t + 1]                # (B, 1) static lane slice
        xp_rz.append(x_t * wi_rz + bi_rz)     # (B, 2H) at lanes 0..2H-1
        xp_n.append(x_t * wi_n + bi_n)        # (B, H)  at lanes 0..H-1

    # ---- Recurrence, fully unrolled (T small & static): two MXU pushes per
    #      step, r kept at lanes 0..H-1 (no rotate), z pays one roll that
    #      hides under the tanh. --------------------------------------------
    h = jnp.zeros((B, H), jnp.float32)
    for t in range(T):
        hp_rz = jnp.dot(h, wh_rz, preferred_element_type=jnp.float32)   # (B, 2H)
        hp_n = jnp.dot(h, wh_n, preferred_element_type=jnp.float32)     # (B, H)
        rz = jax.nn.sigmoid(xp_rz[t] + hp_rz)                            # one EUP pass
        r = rz[:, :H]                          # lanes 0..H-1: aligned with hp_n
        z = rz[:, H:]                          # single lane roll
        n = jnp.tanh(xp_n[t] + r * (hp_n + bhn_b))
        h = (1.0 - z) * n + z * h

    # ---- Final linear on the last hidden state. O == 1 avoids an N=1 MXU
    #      fill/drain right at the end of the dependency chain. -------------
    if O == 1:
        out_ref[...] = jnp.sum(h * wfc, axis=-1, keepdims=True) + bfc
    else:
        out_ref[...] = (
            jax.lax.dot_general(h, wfc, (((1,), (1,)), ((), ())),
                                preferred_element_type=jnp.float32) + bfc)


@jax.jit
def gru_predictor_forward(x, packed):
    """x: (batch, seq_len) -> (batch, output_size)."""
    B, T = x.shape
    H = packed.shape[1] // 3
    O = packed.shape[0] - H - 4
    x = x.astype(jnp.float32)

    vmem = pl.BlockSpec(memory_space=pltpu.MemorySpace.VMEM)
    return pl.pallas_call(
        gru_predictor_kernel,
        out_shape=jax.ShapeDtypeStruct((B, O), jnp.float32),
        in_specs=[vmem, vmem],
        out_specs=vmem,
    )(x, packed)


def init_raw_params(key, input_features, hidden_size, output_size):
    """PyTorch-shaped params: nn.GRU weight_ih (3H,F), weight_hh (3H,H),
    bias_ih (3H,), bias_hh (3H,); nn.Linear weight (O,H), bias (O,)."""
    H, F, O = hidden_size, input_features, output_size
    k = 1.0 / math.sqrt(H)
    keys = jax.random.split(key, 6)
    w_ih = jax.random.uniform(keys[0], (3 * H, F), jnp.float32, -k, k)
    w_hh = jax.random.uniform(keys[1], (3 * H, H), jnp.float32, -k, k)
    b_ih = jax.random.uniform(keys[2], (3 * H,), jnp.float32, -k, k)
    b_hh = jax.random.uniform(keys[3], (3 * H,), jnp.float32, -k, k)
    w_fc = jax.random.uniform(keys[4], (O, H), jnp.float32, -k, k)
    b_fc = jax.random.uniform(keys[5], (O,), jnp.float32, -k, k)
    return (w_ih, w_hh, b_ih, b_hh, w_fc, b_fc)


def pack_params(raw):
    """One-time layout plumbing: fuse gates (r|z|n order), pre-transpose, and
    pack every parameter into a single (H+4+O, 3H) f32 slab (one DMA)."""
    w_ih, w_hh, b_ih, b_hh, w_fc, b_fc = raw
    H = w_hh.shape[1]
    O = w_fc.shape[0]
    F = w_ih.shape[1]
    assert F == 1, "fused kernel path assumes input_features == 1"
    assert O <= 3 * H, "output head wider than the packed slab"
    H2, H3 = 2 * H, 3 * H

    wi = w_ih.reshape(H3)                                        # (3H,)
    bi = jnp.concatenate([b_ih[:H2] + b_hh[:H2], b_ih[H2:]])     # r,z fused; n = b_in
    wh = w_hh.T                                                  # (H, 3H)

    P = jnp.zeros((H + 4 + O, H3), jnp.float32)
    P = P.at[:H, :].set(wh)                     # [W_hr^T | W_hz^T | W_hn^T]
    P = P.at[H, :].set(wi)
    P = P.at[H + 1, :].set(bi)
    P = P.at[H + 2, :H].set(b_hh[H2:])          # b_hn
    P = P.at[H + 3:H + 3 + O, :H].set(w_fc)     # (O, H)
    P = P.at[H + 3 + O, :O].set(b_fc)
    return P


def gru_predictor_ref(x, raw):
    """Pure-JAX reference implementing PyTorch nn.GRU + nn.Linear directly."""
    w_ih, w_hh, b_ih, b_hh, w_fc, b_fc = raw
    B, T = x.shape
    H = w_hh.shape[1]
    h = jnp.zeros((B, H), jnp.float32)
    xs = x.astype(jnp.float32)[..., None]       # (B, T, F=1)
    for t in range(T):
        x_t = xs[:, t, :]
        gi = x_t @ w_ih.T + b_ih                # (B, 3H)
        gh = h @ w_hh.T + b_hh                  # (B, 3H)
        r = jax.nn.sigmoid(gi[:, :H] + gh[:, :H])
        z = jax.nn.sigmoid(gi[:, H:2 * H] + gh[:, H:2 * H])
        n = jnp.tanh(gi[:, 2 * H:] + r * gh[:, 2 * H:])
        h = (1.0 - z) * n + z * h
    return h @ w_fc.T + b_fc


if __name__ == "__main__":
    input_features = 1
    hidden_size = 32
    output_size = 1
    batch = 8          # fills all 8 sublanes of the recurrence vregs
    seq_len = 8

    key = jax.random.PRNGKey(0)
    k_x, k_p = jax.random.split(key)
    x = jax.random.normal(k_x, (batch, seq_len), jnp.float32)
    raw = init_raw_params(k_p, input_features, hidden_size, output_size)
    packed = pack_params(raw)

    out = gru_predictor_forward(x, packed)
    out = jax.block_until_ready(out)

    ref = gru_predictor_ref(x, raw)
    assert out.shape == (batch, output_size)
    assert jnp.allclose(out, ref, atol=1e-5, rtol=1e-5), (out, ref)

    print("KERNEL_OK")
</pallas_src>

<mosaic_0001>
module attributes {stable_mosaic.version = 11 : i64} {
  func.func @gru_predictor_kernel(%arg0: memref<8x8xf32, #tpu.memory_space<vmem>>, %arg1: memref<37x96xf32, #tpu.memory_space<vmem>>, %arg2: memref<8x1xf32, #tpu.memory_space<vmem>>) attributes {dimension_semantics = [], scalar_prefetch = 0 : i64, scratch_operands = 0 : i64, tpu.core_type = #tpu.core_type<tc>} {
    %c0 = arith.constant 0 : index
    %c0_0 = arith.constant 0 : index
    %0 = vector.load %arg1[%c0, %c0_0] : memref<37x96xf32, #tpu.memory_space<vmem>>, vector<32x64xf32>
    %c0_1 = arith.constant 0 : index
    %c64 = arith.constant 64 : index
    %1 = vector.load %arg1[%c0_1, %c64] : memref<37x96xf32, #tpu.memory_space<vmem>>, vector<32x32xf32>
    %c32 = arith.constant 32 : index
    %c0_2 = arith.constant 0 : index
    %2 = vector.load %arg1[%c32, %c0_2] : memref<37x96xf32, #tpu.memory_space<vmem>>, vector<1x64xf32>
    %c32_3 = arith.constant 32 : index
    %c64_4 = arith.constant 64 : index
    %3 = vector.load %arg1[%c32_3, %c64_4] : memref<37x96xf32, #tpu.memory_space<vmem>>, vector<1x32xf32>
    %c33 = arith.constant 33 : index
    %c0_5 = arith.constant 0 : index
    %4 = vector.load %arg1[%c33, %c0_5] : memref<37x96xf32, #tpu.memory_space<vmem>>, vector<1x64xf32>
    %c33_6 = arith.constant 33 : index
    %c64_7 = arith.constant 64 : index
    %5 = vector.load %arg1[%c33_6, %c64_7] : memref<37x96xf32, #tpu.memory_space<vmem>>, vector<1x32xf32>
    %c34 = arith.constant 34 : index
    %c0_8 = arith.constant 0 : index
    %6 = vector.load %arg1[%c34, %c0_8] : memref<37x96xf32, #tpu.memory_space<vmem>>, vector<1x32xf32>
    %c35 = arith.constant 35 : index
    %c0_9 = arith.constant 0 : index
    %7 = vector.load %arg1[%c35, %c0_9] : memref<37x96xf32, #tpu.memory_space<vmem>>, vector<1x32xf32>
    %c36 = arith.constant 36 : index
    %c0_10 = arith.constant 0 : index
    %8 = vector.load %arg1[%c36, %c0_10] : memref<37x96xf32, #tpu.memory_space<vmem>>, vector<1x1xf32>
    %9 = vector.shape_cast %6 : vector<1x32xf32> to vector<1x32xf32>
    %10 = vector.broadcast %9 : vector<1x32xf32> to vector<8x32xf32>
    %c0_11 = arith.constant 0 : index
    %c0_12 = arith.constant 0 : index
    %11 = vector.load %arg0[%c0_11, %c0_12] : memref<8x8xf32, #tpu.memory_space<vmem>>, vector<8x8xf32>
    %12 = vector.extract_strided_slice %11 {offsets = [0, 0], sizes = [8, 1], strides = [1, 1]} : vector<8x8xf32> to vector<8x1xf32>
    %13 = vector.broadcast %12 : vector<8x1xf32> to vector<8x64xf32>
    %14 = vector.broadcast %2 : vector<1x64xf32> to vector<8x64xf32>
    %15 = arith.mulf %13, %14 : vector<8x64xf32>
    %16 = vector.broadcast %4 : vector<1x64xf32> to vector<8x64xf32>
    %17 = arith.addf %15, %16 : vector<8x64xf32>
    %18 = vector.broadcast %12 : vector<8x1xf32> to vector<8x32xf32>
    %19 = vector.broadcast %3 : vector<1x32xf32> to vector<8x32xf32>
    %20 = arith.mulf %18, %19 : vector<8x32xf32>
    %21 = vector.broadcast %5 : vector<1x32xf32> to vector<8x32xf32>
    %22 = arith.addf %20, %21 : vector<8x32xf32>
    %23 = vector.extract_strided_slice %11 {offsets = [0, 1], sizes = [8, 1], strides = [1, 1]} : vector<8x8xf32> to vector<8x1xf32>
    %24 = vector.broadcast %23 : vector<8x1xf32> to vector<8x64xf32>
    %25 = vector.broadcast %2 : vector<1x64xf32> to vector<8x64xf32>
    %26 = arith.mulf %24, %25 : vector<8x64xf32>
    %27 = vector.broadcast %4 : vector<1x64xf32> to vector<8x64xf32>
    %28 = arith.addf %26, %27 : vector<8x64xf32>
    %29 = vector.broadcast %23 : vector<8x1xf32> to vector<8x32xf32>
    %30 = vector.broadcast %3 : vector<1x32xf32> to vector<8x32xf32>
    %31 = arith.mulf %29, %30 : vector<8x32xf32>
    %32 = vector.broadcast %5 : vector<1x32xf32> to vector<8x32xf32>
    %33 = arith.addf %31, %32 : vector<8x32xf32>
    %34 = vector.extract_strided_slice %11 {offsets = [0, 2], sizes = [8, 1], strides = [1, 1]} : vector<8x8xf32> to vector<8x1xf32>
    %35 = vector.broadcast %34 : vector<8x1xf32> to vector<8x64xf32>
    %36 = vector.broadcast %2 : vector<1x64xf32> to vector<8x64xf32>
    %37 = arith.mulf %35, %36 : vector<8x64xf32>
    %38 = vector.broadcast %4 : vector<1x64xf32> to vector<8x64xf32>
    %39 = arith.addf %37, %38 : vector<8x64xf32>
    %40 = vector.broadcast %34 : vector<8x1xf32> to vector<8x32xf32>
    %41 = vector.broadcast %3 : vector<1x32xf32> to vector<8x32xf32>
    %42 = arith.mulf %40, %41 : vector<8x32xf32>
    %43 = vector.broadcast %5 : vector<1x32xf32> to vector<8x32xf32>
    %44 = arith.addf %42, %43 : vector<8x32xf32>
    %45 = vector.extract_strided_slice %11 {offsets = [0, 3], sizes = [8, 1], strides = [1, 1]} : vector<8x8xf32> to vector<8x1xf32>
    %46 = vector.broadcast %45 : vector<8x1xf32> to vector<8x64xf32>
    %47 = vector.broadcast %2 : vector<1x64xf32> to vector<8x64xf32>
    %48 = arith.mulf %46, %47 : vector<8x64xf32>
    %49 = vector.broadcast %4 : vector<1x64xf32> to vector<8x64xf32>
    %50 = arith.addf %48, %49 : vector<8x64xf32>
    %51 = vector.broadcast %45 : vector<8x1xf32> to vector<8x32xf32>
    %52 = vector.broadcast %3 : vector<1x32xf32> to vector<8x32xf32>
    %53 = arith.mulf %51, %52 : vector<8x32xf32>
    %54 = vector.broadcast %5 : vector<1x32xf32> to vector<8x32xf32>
    %55 = arith.addf %53, %54 : vector<8x32xf32>
    %56 = vector.extract_strided_slice %11 {offsets = [0, 4], sizes = [8, 1], strides = [1, 1]} : vector<8x8xf32> to vector<8x1xf32>
    %57 = vector.broadcast %56 : vector<8x1xf32> to vector<8x64xf32>
    %58 = vector.broadcast %2 : vector<1x64xf32> to vector<8x64xf32>
    %59 = arith.mulf %57, %58 : vector<8x64xf32>
    %60 = vector.broadcast %4 : vector<1x64xf32> to vector<8x64xf32>
    %61 = arith.addf %59, %60 : vector<8x64xf32>
    %62 = vector.broadcast %56 : vector<8x1xf32> to vector<8x32xf32>
    %63 = vector.broadcast %3 : vector<1x32xf32> to vector<8x32xf32>
    %64 = arith.mulf %62, %63 : vector<8x32xf32>
    %65 = vector.broadcast %5 : vector<1x32xf32> to vector<8x32xf32>
    %66 = arith.addf %64, %65 : vector<8x32xf32>
    %67 = vector.extract_strided_slice %11 {offsets = [0, 5], sizes = [8, 1], strides = [1, 1]} : vector<8x8xf32> to vector<8x1xf32>
    %68 = vector.broadcast %67 : vector<8x1xf32> to vector<8x64xf32>
    %69 = vector.broadcast %2 : vector<1x64xf32> to vector<8x64xf32>
    %70 = arith.mulf %68, %69 : vector<8x64xf32>
    %71 = vector.broadcast %4 : vector<1x64xf32> to vector<8x64xf32>
    %72 = arith.addf %70, %71 : vector<8x64xf32>
    %73 = vector.broadcast %67 : vector<8x1xf32> to vector<8x32xf32>
    %74 = vector.broadcast %3 : vector<1x32xf32> to vector<8x32xf32>
    %75 = arith.mulf %73, %74 : vector<8x32xf32>
    %76 = vector.broadcast %5 : vector<1x32xf32> to vector<8x32xf32>
    %77 = arith.addf %75, %76 : vector<8x32xf32>
    %78 = vector.extract_strided_slice %11 {offsets = [0, 6], sizes = [8, 1], strides = [1, 1]} : vector<8x8xf32> to vector<8x1xf32>
    %79 = vector.broadcast %78 : vector<8x1xf32> to vector<8x64xf32>
    %80 = vector.broadcast %2 : vector<1x64xf32> to vector<8x64xf32>
    %81 = arith.mulf %79, %80 : vector<8x64xf32>
    %82 = vector.broadcast %4 : vector<1x64xf32> to vector<8x64xf32>
    %83 = arith.addf %81, %82 : vector<8x64xf32>
    %84 = vector.broadcast %78 : vector<8x1xf32> to vector<8x32xf32>
    %85 = vector.broadcast %3 : vector<1x32xf32> to vector<8x32xf32>
    %86 = arith.mulf %84, %85 : vector<8x32xf32>
    %87 = vector.broadcast %5 : vector<1x32xf32> to vector<8x32xf32>
    %88 = arith.addf %86, %87 : vector<8x32xf32>
    %89 = vector.extract_strided_slice %11 {offsets = [0, 7], sizes = [8, 1], strides = [1, 1]} : vector<8x8xf32> to vector<8x1xf32>
    %90 = vector.broadcast %89 : vector<8x1xf32> to vector<8x64xf32>
    %91 = vector.broadcast %2 : vector<1x64xf32> to vector<8x64xf32>
    %92 = arith.mulf %90, %91 : vector<8x64xf32>
    %93 = vector.broadcast %4 : vector<1x64xf32> to vector<8x64xf32>
    %94 = arith.addf %92, %93 : vector<8x64xf32>
    %95 = vector.broadcast %89 : vector<8x1xf32> to vector<8x32xf32>
    %96 = vector.broadcast %3 : vector<1x32xf32> to vector<8x32xf32>
    %97 = arith.mulf %95, %96 : vector<8x32xf32>
    %98 = vector.broadcast %5 : vector<1x32xf32> to vector<8x32xf32>
    %99 = arith.addf %97, %98 : vector<8x32xf32>
    %cst = arith.constant 0.000000e+00 : f32
    %100 = vector.broadcast %cst : f32 to vector<8x32xf32>
    %cst_13 = arith.constant dense<0.000000e+00> : vector<8x64xf32>
    %101 = tpu.matmul %100, %0, %cst_13 {dimension_numbers = #tpu.dot_dimension_numbers<[1], [0], [0], [1], [0, 0, 1, 1], [], []>} : vector<8x32xf32>, vector<32x64xf32>, vector<8x64xf32> -> vector<8x64xf32>
    %cst_14 = arith.constant dense<0.000000e+00> : vector<8x32xf32>
    %102 = tpu.matmul %100, %1, %cst_14 {dimension_numbers = #tpu.dot_dimension_numbers<[1], [0], [0], [1], [0, 0, 1, 1], [], []>} : vector<8x32xf32>, vector<32x32xf32>, vector<8x32xf32> -> vector<8x32xf32>
    %103 = arith.addf %17, %101 : vector<8x64xf32>
    %104 = arith.negf %103 : vector<8x64xf32>
    %105 = math.exp %104 : vector<8x64xf32>
    %cst_15 = arith.constant 1.000000e+00 : f32
    %106 = vector.broadcast %cst_15 : f32 to vector<8x64xf32>
    %107 = arith.addf %106, %105 : vector<8x64xf32>
    %108 = arith.divf %106, %107 : vector<8x64xf32>
    %109 = vector.extract_strided_slice %108 {offsets = [0, 0], sizes = [8, 32], strides = [1, 1]} : vector<8x64xf32> to vector<8x32xf32>
    %110 = vector.extract_strided_slice %108 {offsets = [0, 32], sizes = [8, 32], strides = [1, 1]} : vector<8x64xf32> to vector<8x32xf32>
    %111 = arith.addf %102, %10 : vector<8x32xf32>
    %112 = arith.mulf %109, %111 : vector<8x32xf32>
    %113 = arith.addf %22, %112 : vector<8x32xf32>
    %114 = math.tanh %113 : vector<8x32xf32>
    %cst_16 = arith.constant 1.000000e+00 : f32
    %115 = vector.broadcast %cst_16 : f32 to vector<8x32xf32>
    %116 = arith.subf %115, %110 : vector<8x32xf32>
    %117 = arith.mulf %116, %114 : vector<8x32xf32>
    %118 = arith.mulf %110, %100 : vector<8x32xf32>
    %119 = arith.addf %117, %118 : vector<8x32xf32>
    %cst_17 = arith.constant dense<0.000000e+00> : vector<8x64xf32>
    %120 = tpu.matmul %119, %0, %cst_17 {dimension_numbers = #tpu.dot_dimension_numbers<[1], [0], [0], [1], [0, 0, 1, 1], [], []>} : vector<8x32xf32>, vector<32x64xf32>, vector<8x64xf32> -> vector<8x64xf32>
    %cst_18 = arith.constant dense<0.000000e+00> : vector<8x32xf32>
    %121 = tpu.matmul %119, %1, %cst_18 {dimension_numbers = #tpu.dot_dimension_numbers<[1], [0], [0], [1], [0, 0, 1, 1], [], []>} : vector<8x32xf32>, vector<32x32xf32>, vector<8x32xf32> -> vector<8x32xf32>
    %122 = arith.addf %28, %120 : vector<8x64xf32>
    %123 = arith.negf %122 : vector<8x64xf32>
    %124 = math.exp %123 : vector<8x64xf32>
    %cst_19 = arith.constant 1.000000e+00 : f32
    %125 = vector.broadcast %cst_19 : f32 to vector<8x64xf32>
    %126 = arith.addf %125, %124 : vector<8x64xf32>
    %127 = arith.divf %125, %126 : vector<8x64xf32>
    %128 = vector.extract_strided_slice %127 {offsets = [0, 0], sizes = [8, 32], strides = [1, 1]} : vector<8x64xf32> to vector<8x32xf32>
    %129 = vector.extract_strided_slice %127 {offsets = [0, 32], sizes = [8, 32], strides = [1, 1]} : vector<8x64xf32> to vector<8x32xf32>
    %130 = arith.addf %121, %10 : vector<8x32xf32>
    %131 = arith.mulf %128, %130 : vector<8x32xf32>
    %132 = arith.addf %33, %131 : vector<8x32xf32>
    %133 = math.tanh %132 : vector<8x32xf32>
    %cst_20 = arith.constant 1.000000e+00 : f32
    %134 = vector.broadcast %cst_20 : f32 to vector<8x32xf32>
    %135 = arith.subf %134, %129 : vector<8x32xf32>
    %136 = arith.mulf %135, %133 : vector<8x32xf32>
    %137 = arith.mulf %129, %119 : vector<8x32xf32>
    %138 = arith.addf %136, %137 : vector<8x32xf32>
    %cst_21 = arith.constant dense<0.000000e+00> : vector<8x64xf32>
    %139 = tpu.matmul %138, %0, %cst_21 {dimension_numbers = #tpu.dot_dimension_numbers<[1], [0], [0], [1], [0, 0, 1, 1], [], []>} : vector<8x32xf32>, vector<32x64xf32>, vector<8x64xf32> -> vector<8x64xf32>
    %cst_22 = arith.constant dense<0.000000e+00> : vector<8x32xf32>
    %140 = tpu.matmul %138, %1, %cst_22 {dimension_numbers = #tpu.dot_dimension_numbers<[1], [0], [0], [1], [0, 0, 1, 1], [], []>} : vector<8x32xf32>, vector<32x32xf32>, vector<8x32xf32> -> vector<8x32xf32>
    %141 = arith.addf %39, %139 : vector<8x64xf32>
    %142 = arith.negf %141 : vector<8x64xf32>
    %143 = math.exp %142 : vector<8x64xf32>
    %cst_23 = arith.constant 1.000000e+00 : f32
    %144 = vector.broadcast %cst_23 : f32 to vector<8x64xf32>
    %145 = arith.addf %144, %143 : vector<8x64xf32>
    %146 = arith.divf %144, %145 : vector<8x64xf32>
    %147 = vector.extract_strided_slice %146 {offsets = [0, 0], sizes = [8, 32], strides = [1, 1]} : vector<8x64xf32> to vector<8x32xf32>
    %148 = vector.extract_strided_slice %146 {offsets = [0, 32], sizes = [8, 32], strides = [1, 1]} : vector<8x64xf32> to vector<8x32xf32>
    %149 = arith.addf %140, %10 : vector<8x32xf32>
    %150 = arith.mulf %147, %149 : vector<8x32xf32>
    %151 = arith.addf %44, %150 : vector<8x32xf32>
    %152 = math.tanh %151 : vector<8x32xf32>
    %cst_24 = arith.constant 1.000000e+00 : f32
    %153 = vector.broadcast %cst_24 : f32 to vector<8x32xf32>
    %154 = arith.subf %153, %148 : vector<8x32xf32>
    %155 = arith.mulf %154, %152 : vector<8x32xf32>
    %156 = arith.mulf %148, %138 : vector<8x32xf32>
    %157 = arith.addf %155, %156 : vector<8x32xf32>
    %cst_25 = arith.constant dense<0.000000e+00> : vector<8x64xf32>
    %158 = tpu.matmul %157, %0, %cst_25 {dimension_numbers = #tpu.dot_dimension_numbers<[1], [0], [0], [1], [0, 0, 1, 1], [], []>} : vector<8x32xf32>, vector<32x64xf32>, vector<8x64xf32> -> vector<8x64xf32>
    %cst_26 = arith.constant dense<0.000000e+00> : vector<8x32xf32>
    %159 = tpu.matmul %157, %1, %cst_26 {dimension_numbers = #tpu.dot_dimension_numbers<[1], [0], [0], [1], [0, 0, 1, 1], [], []>} : vector<8x32xf32>, vector<32x32xf32>, vector<8x32xf32> -> vector<8x32xf32>
    %160 = arith.addf %50, %158 : vector<8x64xf32>
    %161 = arith.negf %160 : vector<8x64xf32>
    %162 = math.exp %161 : vector<8x64xf32>
    %cst_27 = arith.constant 1.000000e+00 : f32
    %163 = vector.broadcast %cst_27 : f32 to vector<8x64xf32>
    %164 = arith.addf %163, %162 : vector<8x64xf32>
    %165 = arith.divf %163, %164 : vector<8x64xf32>
    %166 = vector.extract_strided_slice %165 {offsets = [0, 0], sizes = [8, 32], strides = [1, 1]} : vector<8x64xf32> to vector<8x32xf32>
    %167 = vector.extract_strided_slice %165 {offsets = [0, 32], sizes = [8, 32], strides = [1, 1]} : vector<8x64xf32> to vector<8x32xf32>
    %168 = arith.addf %159, %10 : vector<8x32xf32>
    %169 = arith.mulf %166, %168 : vector<8x32xf32>
    %170 = arith.addf %55, %169 : vector<8x32xf32>
    %171 = math.tanh %170 : vector<8x32xf32>
    %cst_28 = arith.constant 1.000000e+00 : f32
    %172 = vector.broadcast %cst_28 : f32 to vector<8x32xf32>
    %173 = arith.subf %172, %167 : vector<8x32xf32>
    %174 = arith.mulf %173, %171 : vector<8x32xf32>
    %175 = arith.mulf %167, %157 : vector<8x32xf32>
    %176 = arith.addf %174, %175 : vector<8x32xf32>
    %cst_29 = arith.constant dense<0.000000e+00> : vector<8x64xf32>
    %177 = tpu.matmul %176, %0, %cst_29 {dimension_numbers = #tpu.dot_dimension_numbers<[1], [0], [0], [1], [0, 0, 1, 1], [], []>} : vector<8x32xf32>, vector<32x64xf32>, vector<8x64xf32> -> vector<8x64xf32>
    %cst_30 = arith.constant dense<0.000000e+00> : vector<8x32xf32>
    %178 = tpu.matmul %176, %1, %cst_30 {dimension_numbers = #tpu.dot_dimension_numbers<[1], [0], [0], [1], [0, 0, 1, 1], [], []>} : vector<8x32xf32>, vector<32x32xf32>, vector<8x32xf32> -> vector<8x32xf32>
    %179 = arith.addf %61, %177 : vector<8x64xf32>
    %180 = arith.negf %179 : vector<8x64xf32>
    %181 = math.exp %180 : vector<8x64xf32>
    %cst_31 = arith.constant 1.000000e+00 : f32
    %182 = vector.broadcast %cst_31 : f32 to vector<8x64xf32>
    %183 = arith.addf %182, %181 : vector<8x64xf32>
    %184 = arith.divf %182, %183 : vector<8x64xf32>
    %185 = vector.extract_strided_slice %184 {offsets = [0, 0], sizes = [8, 32], strides = [1, 1]} : vector<8x64xf32> to vector<8x32xf32>
    %186 = vector.extract_strided_slice %184 {offsets = [0, 32], sizes = [8, 32], strides = [1, 1]} : vector<8x64xf32> to vector<8x32xf32>
    %187 = arith.addf %178, %10 : vector<8x32xf32>
    %188 = arith.mulf %185, %187 : vector<8x32xf32>
    %189 = arith.addf %66, %188 : vector<8x32xf32>
    %190 = math.tanh %189 : vector<8x32xf32>
    %cst_32 = arith.constant 1.000000e+00 : f32
    %191 = vector.broadcast %cst_32 : f32 to vector<8x32xf32>
    %192 = arith.subf %191, %186 : vector<8x32xf32>
    %193 = arith.mulf %192, %190 : vector<8x32xf32>
    %194 = arith.mulf %186, %176 : vector<8x32xf32>
    %195 = arith.addf %193, %194 : vector<8x32xf32>
    %cst_33 = arith.constant dense<0.000000e+00> : vector<8x64xf32>
    %196 = tpu.matmul %195, %0, %cst_33 {dimension_numbers = #tpu.dot_dimension_numbers<[1], [0], [0], [1], [0, 0, 1, 1], [], []>} : vector<8x32xf32>, vector<32x64xf32>, vector<8x64xf32> -> vector<8x64xf32>
    %cst_34 = arith.constant dense<0.000000e+00> : vector<8x32xf32>
    %197 = tpu.matmul %195, %1, %cst_34 {dimension_numbers = #tpu.dot_dimension_numbers<[1], [0], [0], [1], [0, 0, 1, 1], [], []>} : vector<8x32xf32>, vector<32x32xf32>, vector<8x32xf32> -> vector<8x32xf32>
    %198 = arith.addf %72, %196 : vector<8x64xf32>
    %199 = arith.negf %198 : vector<8x64xf32>
    %200 = math.exp %199 : vector<8x64xf32>
    %cst_35 = arith.constant 1.000000e+00 : f32
    %201 = vector.broadcast %cst_35 : f32 to vector<8x64xf32>
    %202 = arith.addf %201, %200 : vector<8x64xf32>
    %203 = arith.divf %201, %202 : vector<8x64xf32>
    %204 = vector.extract_strided_slice %203 {offsets = [0, 0], sizes = [8, 32], strides = [1, 1]} : vector<8x64xf32> to vector<8x32xf32>
    %205 = vector.extract_strided_slice %203 {offsets = [0, 32], sizes = [8, 32], strides = [1, 1]} : vector<8x64xf32> to vector<8x32xf32>
    %206 = arith.addf %197, %10 : vector<8x32xf32>
    %207 = arith.mulf %204, %206 : vector<8x32xf32>
    %208 = arith.addf %77, %207 : vector<8x32xf32>
    %209 = math.tanh %208 : vector<8x32xf32>
    %cst_36 = arith.constant 1.000000e+00 : f32
    %210 = vector.broadcast %cst_36 : f32 to vector<8x32xf32>
    %211 = arith.subf %210, %205 : vector<8x32xf32>
    %212 = arith.mulf %211, %209 : vector<8x32xf32>
    %213 = arith.mulf %205, %195 : vector<8x32xf32>
    %214 = arith.addf %212, %213 : vector<8x32xf32>
    %cst_37 = arith.constant dense<0.000000e+00> : vector<8x64xf32>
    %215 = tpu.matmul %214, %0, %cst_37 {dimension_numbers = #tpu.dot_dimension_numbers<[1], [0], [0], [1], [0, 0, 1, 1], [], []>} : vector<8x32xf32>, vector<32x64xf32>, vector<8x64xf32> -> vector<8x64xf32>
    %cst_38 = arith.constant dense<0.000000e+00> : vector<8x32xf32>
    %216 = tpu.matmul %214, %1, %cst_38 {dimension_numbers = #tpu.dot_dimension_numbers<[1], [0], [0], [1], [0, 0, 1, 1], [], []>} : vector<8x32xf32>, vector<32x32xf32>, vector<8x32xf32> -> vector<8x32xf32>
    %217 = arith.addf %83, %215 : vector<8x64xf32>
    %218 = arith.negf %217 : vector<8x64xf32>
    %219 = math.exp %218 : vector<8x64xf32>
    %cst_39 = arith.constant 1.000000e+00 : f32
    %220 = vector.broadcast %cst_39 : f32 to vector<8x64xf32>
    %221 = arith.addf %220, %219 : vector<8x64xf32>
    %222 = arith.divf %220, %221 : vector<8x64xf32>
    %223 = vector.extract_strided_slice %222 {offsets = [0, 0], sizes = [8, 32], strides = [1, 1]} : vector<8x64xf32> to vector<8x32xf32>
    %224 = vector.extract_strided_slice %222 {offsets = [0, 32], sizes = [8, 32], strides = [1, 1]} : vector<8x64xf32> to vector<8x32xf32>
    %225 = arith.addf %216, %10 : vector<8x32xf32>
    %226 = arith.mulf %223, %225 : vector<8x32xf32>
    %227 = arith.addf %88, %226 : vector<8x32xf32>
    %228 = math.tanh %227 : vector<8x32xf32>
    %cst_40 = arith.constant 1.000000e+00 : f32
    %229 = vector.broadcast %cst_40 : f32 to vector<8x32xf32>
    %230 = arith.subf %229, %224 : vector<8x32xf32>
    %231 = arith.mulf %230, %228 : vector<8x32xf32>
    %232 = arith.mulf %224, %214 : vector<8x32xf32>
    %233 = arith.addf %231, %232 : vector<8x32xf32>
    %cst_41 = arith.constant dense<0.000000e+00> : vector<8x64xf32>
    %234 = tpu.matmul %233, %0, %cst_41 {dimension_numbers = #tpu.dot_dimension_numbers<[1], [0], [0], [1], [0, 0, 1, 1], [], []>} : vector<8x32xf32>, vector<32x64xf32>, vector<8x64xf32> -> vector<8x64xf32>
    %cst_42 = arith.constant dense<0.000000e+00> : vector<8x32xf32>
    %235 = tpu.matmul %233, %1, %cst_42 {dimension_numbers = #tpu.dot_dimension_numbers<[1], [0], [0], [1], [0, 0, 1, 1], [], []>} : vector<8x32xf32>, vector<32x32xf32>, vector<8x32xf32> -> vector<8x32xf32>
    %236 = arith.addf %94, %234 : vector<8x64xf32>
    %237 = arith.negf %236 : vector<8x64xf32>
    %238 = math.exp %237 : vector<8x64xf32>
    %cst_43 = arith.constant 1.000000e+00 : f32
    %239 = vector.broadcast %cst_43 : f32 to vector<8x64xf32>
    %240 = arith.addf %239, %238 : vector<8x64xf32>
    %241 = arith.divf %239, %240 : vector<8x64xf32>
    %242 = vector.extract_strided_slice %241 {offsets = [0, 0], sizes = [8, 32], strides = [1, 1]} : vector<8x64xf32> to vector<8x32xf32>
    %243 = vector.extract_strided_slice %241 {offsets = [0, 32], sizes = [8, 32], strides = [1, 1]} : vector<8x64xf32> to vector<8x32xf32>
    %244 = arith.addf %235, %10 : vector<8x32xf32>
    %245 = arith.mulf %242, %244 : vector<8x32xf32>
    %246 = arith.addf %99, %245 : vector<8x32xf32>
    %247 = math.tanh %246 : vector<8x32xf32>
    %cst_44 = arith.constant 1.000000e+00 : f32
    %248 = vector.broadcast %cst_44 : f32 to vector<8x32xf32>
    %249 = arith.subf %248, %243 : vector<8x32xf32>
    %250 = arith.mulf %249, %247 : vector<8x32xf32>
    %251 = arith.mulf %243, %233 : vector<8x32xf32>
    %252 = arith.addf %250, %251 : vector<8x32xf32>
    %253 = vector.broadcast %7 : vector<1x32xf32> to vector<8x32xf32>
    %254 = arith.mulf %252, %253 : vector<8x32xf32>
    %cst_45 = arith.constant dense<0.000000e+00> : vector<8xf32>
    %255 = vector.multi_reduction <add>, %254, %cst_45 [1] : vector<8x32xf32> to vector<8xf32>
    %256 = vector.shape_cast %255 : vector<8xf32> to vector<8x1xf32>
    %257 = vector.broadcast %8 : vector<1x1xf32> to vector<8x1xf32>
    %258 = arith.addf %256, %257 : vector<8x1xf32>
    %c0_46 = arith.constant 0 : index
    %c0_47 = arith.constant 0 : index
    %259 = vector.load %arg2[%c0_46, %c0_47] : memref<8x1xf32, #tpu.memory_space<vmem>>, vector<8x1xf32>
    tpu.vector_store %arg2[%c0_46, %c0_47], %258 {strides = array<i32>} : memref<8x1xf32, #tpu.memory_space<vmem>>, vector<8x1xf32>,
    return
  }
}

</mosaic_0001>

<llo_original>
// kernel: gru_predictor_forward.1
$region0: #{gru_predictor_forward.1}
  #allocation0 [shape = 'u32[]', space=smem, size = 0x4, offset = 0x4, fixed_abs, tag = 'smem constant byte address 0x4 - core index']
  #allocation1 [shape = 'u32[144,128]{1,0:T(1,128)}', space=vmem, size = 0x12000, scoped, tag = 'internal scratch']
  %s0 = inlined_call_operand.hbm [shape: f32[8,8], index: 0, kind: input, shape index: {}]
  %s1 = inlined_call_operand.hbm [shape: f32[37,96], index: 1, kind: input, shape index: {}]
  %s2 = inlined_call_operand.vmem [shape: f32[8,1], index: 2, kind: output, shape index: {}]
  %s3 = sld [smem:[#allocation0]]
  $region26: #{gru_predictor_forward.1} parent=0
    _
  %s5 = ssub.s32 1, %s3
  %s6 = scalar_select 0, %s5, %s3
  $region1: #{gru_predictor_forward.1} parent=0
    #allocation2 [shape = 'u8[4096]{0}', space=vmem, size = 0x1000, scoped, tag = 'input window, operand 0, single buffered']
    #allocation3 [shape = 's32[1]{0}', space=sflag, size = 0x4, scoped, tag = 'scoped memory for gru_predictor_forward.1']
    #allocation4 [shape = 'u8[20480]{0}', space=vmem, size = 0x5000, scoped, tag = 'input window, operand 1, single buffered']
    #allocation5 [shape = 's32[1]{0}', space=sflag, size = 0x4, scoped, tag = 'scoped memory for gru_predictor_forward.1']
    %7 = vsyncpa [#allocation3], 0
    %8 = vsyncpa [#allocation5], 0
    // Predicated region
    $region2: #{gru_predictor_forward.1} parent=1 // pred_check
      _
    $region3: #{gru_predictor_forward.1} parent=1 // pred_check_branch
      %10 = sbr.rel (0) target = $region5
    $region4: #{gru_predictor_forward.1} parent=1 // pred_region
      %s12 = ssub.s32 128, 128
      %13 = vsyncadd [#allocation3], %s12
      %s15 = sshll.u32 [#allocation2], 4
      %s16 = int_to_ptr.vmem [resolvable:$true] %s15
      %18 = dma.hbm_to_vmem [thread:$0]  %s0, 128, %s16, [#allocation3]
    $region5: #{gru_predictor_forward.1} parent=1 // pred_fallthru
      _
    // Predicated region
    $region6: #{gru_predictor_forward.1} parent=1 // pred_check
      _
    $region7: #{gru_predictor_forward.1} parent=1 // pred_check_branch
      %20 = sbr.rel (0) target = $region9
    $region8: #{gru_predictor_forward.1} parent=1 // pred_region
      %s22 = ssub.s32 640, 640
      %23 = vsyncadd [#allocation5], %s22
      %s24 = sshll.u32 [#allocation4], 4
      %s25 = int_to_ptr.vmem [resolvable:$true] %s24
      %30 = dma.hbm_to_vmem [thread:$0]  %s1, 640, %s25, [#allocation5], 128, 128, 8
    $region9: #{gru_predictor_forward.1} parent=1 // pred_fallthru
      _
    // Predicated region
    $region10: #{gru_predictor_forward.1} parent=1 // pred_check
      _
    $region11: #{gru_predictor_forward.1} parent=1 // pred_check_branch
      %32 = sbr.rel (0) target = $region13
    $region12: #{gru_predictor_forward.1} parent=1 // pred_region
      %33 = dma.done [#allocation3], 128
    $region13: #{gru_predictor_forward.1} parent=1 // pred_fallthru
      _
    // Predicated region
    $region14: #{gru_predictor_forward.1} parent=1 // pred_check
      _
    $region15: #{gru_predictor_forward.1} parent=1 // pred_check_branch
      %35 = sbr.rel (0) target = $region17
    $region16: #{gru_predictor_forward.1} parent=1 // pred_region
      %36 = dma.done [#allocation5], 640
    $region17: #{gru_predictor_forward.1} parent=1 // pred_fallthru
      _
    %v37 = vld [vmem:[#allocation4] sm:$0xff]
    %v38 = vld [vmem:[#allocation4 + $0x8] sm:$0xff]
    %v39 = vld [vmem:[#allocation4 + $0x10] sm:$0xff]
    %v40 = vld [vmem:[#allocation4 + $0x18] sm:$0xff]
    %v41 = vld [vmem:[#allocation4 + $0x20] sm:$0x1]
    %v42 = vld [vmem:[#allocation4 + $0x21] sm:$0x1]
    %v43 = vld [vmem:[#allocation4 + $0x22] sm:$0x1]
    %v44 = vld [vmem:[#allocation4 + $0x23] sm:$0x1]
    %v45 = vld [vmem:[#allocation4 + $0x24] sm:$0x1]
    %v46 = vlaneseq
    %v47 = vshrl.u32 %v46, 7
    %v48 = vsub.s32 0, %v47
    %v49 = vrot.slane %v43, %v48
    %v50 = vld [vmem:[#allocation2] sm:$0xff]
    %52 = vset.pattern.permute.xlu0 0
    %53 = vperm.xlu0 %52, %v50
    %v54 = vpop.permute.xlu0 %53
    %v56 = vlaneseq
    %v57 = vshrl.u32 %v56, 7
    %v58 = vsub.s32 0, %v57
    %v59 = vrot.slane %v41, %v58
    %v60 = vmul.f32 %v54, %v59
    %v61 = vlaneseq
    %v62 = vshrl.u32 %v61, 7
    %v63 = vsub.s32 0, %v62
    %v64 = vrot.slane %v42, %v63
    %v65 = vadd.f32 %v60, %v64
    %66 = vset.pattern.permute.xlu0 1
    %67 = vperm.xlu0 %66, %v50
    %v68 = vpop.permute.xlu0 %67
    %v70 = vmul.f32 %v68, %v59
    %v71 = vadd.f32 %v70, %v64
    %72 = vset.pattern.permute.xlu0 2
    %73 = vperm.xlu0 %72, %v50
    %v74 = vpop.permute.xlu0 %73
    %v76 = vmul.f32 %v74, %v59
    %v77 = vadd.f32 %v76, %v64
    %78 = vset.pattern.permute.xlu0 3
    %79 = vperm.xlu0 %78, %v50
    %v80 = vpop.permute.xlu0 %79
    %v82 = vmul.f32 %v80, %v59
    %v83 = vadd.f32 %v82, %v64
    %84 = vset.pattern.permute.xlu0 4
    %85 = vperm.xlu0 %84, %v50
    %v86 = vpop.permute.xlu0 %85
    %v88 = vmul.f32 %v86, %v59
    %v89 = vadd.f32 %v88, %v64
    %90 = vset.pattern.permute.xlu0 5
    %91 = vperm.xlu0 %90, %v50
    %v92 = vpop.permute.xlu0 %91
    %v94 = vmul.f32 %v92, %v59
    %v95 = vadd.f32 %v94, %v64
    %96 = vset.pattern.permute.xlu0 6
    %97 = vperm.xlu0 %96, %v50
    %v98 = vpop.permute.xlu0 %97
    %v100 = vmul.f32 %v98, %v59
    %v101 = vadd.f32 %v100, %v64
    %102 = vset.pattern.permute.xlu0 7
    %103 = vperm.xlu0 %102, %v50
    %v104 = vpop.permute.xlu0 %103
    %v106 = vmul.f32 %v104, %v59
    %v107 = vadd.f32 %v106, %v64
    %vm108 = vcmask 261120
    %v110 = vsel %vm108, 0.0, 0
    %112 = vmatprep.subr.mxu0 0.0
    %113 = vmatpush1.msra.mxu0 %v37
    %114 = vmatprep.subr.mxu0 0.0
    %115 = vmatpush1.msra.mxu0 %v38
    %116 = vmatprep.subr.mxu0 0.0
    %117 = vmatpush1.msra.mxu0 %v39
    %118 = vmatprep.subr.mxu0 0.0
    %119 = vmatpush1.msra.mxu0 %v40
    %120 = vmatprep.subr.mxu0 0.0
    %121 = vmatpush1.msra.mxu0 0.0
    %122 = vmatprep.subr.mxu0 0.0
    %123 = vmatpush1.msra.mxu0 0.0
    %124 = vmatprep.subr.mxu0 0.0
    %125 = vmatpush1.msra.mxu0 0.0
    %126 = vmatprep.subr.mxu0 0.0
    %127 = vmatpush1.msra.mxu0 0.0
    %128 = vmatprep.subr.mxu0 0.0
    %129 = vmatpush1.msra.mxu0 0.0
    %130 = vmatprep.subr.mxu0 0.0
    %131 = vmatpush1.msra.mxu0 0.0
    %132 = vmatprep.subr.mxu0 0.0
    %133 = vmatpush1.msra.mxu0 0.0
    %134 = vmatprep.subr.mxu0 0.0
    %135 = vmatpush1.msra.mxu0 0.0
    %136 = vmatprep.subr.mxu0 0.0
    %137 = vmatpush1.msra.mxu0 0.0
    %138 = vmatprep.subr.mxu0 0.0
    %139 = vmatpush1.msra.mxu0 0.0
    %140 = vmatprep.subr.mxu0 0.0
    %141 = vmatpush1.msra.mxu0 0.0
    %142 = vmatprep.subr.mxu0 0.0
    %143 = vmatpush1.msra.mxu0 0.0
    %144 = vmatprep.subr.mxu0 0.0
    %145 = vmatpush1.msra.mxu0 0.0
    %146 = vmatprep.subr.mxu0 0.0
    %147 = vmatpush1.msra.mxu0 0.0
    %148 = vmatprep.subr.mxu0 0.0
    %149 = vmatpush1.msra.mxu0 0.0
    %150 = vmatprep.subr.mxu0 0.0
    %151 = vmatpush1.msra.mxu0 0.0
    %152 = vmatprep.subr.mxu0 0.0
    %153 = vmatpush1.msra.mxu0 0.0
    %154 = vmatprep.subr.mxu0 0.0
    %155 = vmatpush1.msra.mxu0 0.0
    %156 = vmatprep.subr.mxu0 0.0
    %157 = vmatpush1.msra.mxu0 0.0
    %158 = vmatprep.subr.mxu0 0.0
    %159 = vmatpush1.msra.mxu0 0.0
    %160 = vmatprep.subr.mxu0 0.0
    %161 = vmatpush1.msra.mxu0 0.0
    %162 = vmatprep.subr.mxu0 0.0
    %163 = vmatpush1.msra.mxu0 0.0
    %164 = vmatprep.subr.mxu0 0.0
    %165 = vmatpush1.msra.mxu0 0.0
    %166 = vmatprep.subr.mxu0 0.0
    %167 = vmatpush1.msra.mxu0 0.0
    %168 = vmatprep.subr.mxu0 0.0
    %169 = vmatpush1.msra.mxu0 0.0
    %170 = vmatprep.subr.mxu0 0.0
    %171 = vmatpush1.msra.mxu0 0.0
    %172 = vmatprep.subr.mxu0 0.0
    %173 = vmatpush1.msra.mxu0 0.0
    %174 = vmatprep.subr.mxu0 0.0
    %175 = vmatpush1.msra.mxu0 0.0
    %176 = vmatprep.mubr.f32.mxu0 0.0
    %177 = vmatmul.mubr.f32.gmra.mrb[0].mxu0 %v110
    %v178 = vpop.f32.mrb[0].mxu0
    %v179 = vadd.f32 0.0, %v178
    %v180 = vpop.f32.mrb[0].mxu0
    %181 = vdwg.mxu0
    %v182 = vadd.f32 %v65, %v179
    %v183 = vxor.u32 %v182, 2147483648
    %v184 = vmul.f32 %v183, 1.442695
    %v185 = vpow.pop %v184
    %v186 = vadd.f32 %v185, 1.0
    %v187 = vrcp.pop %v186
    %v188 = vmul.f32 1.0, %v187
    %193 = vrot.lane.b32.xlu0 %v37, 64
    %v194 = vpop.permute.xlu0 %193
    %195 = vrot.lane.b32.xlu0 %v38, 64
    %v196 = vpop.permute.xlu0 %195
    %197 = vrot.lane.b32.xlu0 %v39, 64
    %v198 = vpop.permute.xlu0 %197
    %199 = vrot.lane.b32.xlu0 %v40, 64
    %v200 = vpop.permute.xlu0 %199
    %205 = vmatprep.subr.mxu0 0.0
    %206 = vmatpush1.msra.mxu0 %v194
    %207 = vmatprep.subr.mxu0 0.0
    %208 = vmatpush1.msra.mxu0 %v196
    %209 = vmatprep.subr.mxu0 0.0
    %210 = vmatpush1.msra.mxu0 %v198
    %211 = vmatprep.subr.mxu0 0.0
    %212 = vmatpush1.msra.mxu0 %v200
    %213 = vmatprep.subr.mxu0 0.0
    %214 = vmatpush1.msra.mxu0 0.0
    %215 = vmatprep.subr.mxu0 0.0
    %216 = vmatpush1.msra.mxu0 0.0
    %217 = vmatprep.subr.mxu0 0.0
    %218 = vmatpush1.msra.mxu0 0.0
    %219 = vmatprep.subr.mxu0 0.0
    %220 = vmatpush1.msra.mxu0 0.0
    %221 = vmatprep.subr.mxu0 0.0
    %222 = vmatpush1.msra.mxu0 0.0
    %223 = vmatprep.subr.mxu0 0.0
    %224 = vmatpush1.msra.mxu0 0.0
    %225 = vmatprep.subr.mxu0 0.0
    %226 = vmatpush1.msra.mxu0 0.0
    %227 = vmatprep.subr.mxu0 0.0
    %228 = vmatpush1.msra.mxu0 0.0
    %229 = vmatprep.subr.mxu0 0.0
    %230 = vmatpush1.msra.mxu0 0.0
    %231 = vmatprep.subr.mxu0 0.0
    %232 = vmatpush1.msra.mxu0 0.0
    %233 = vmatprep.subr.mxu0 0.0
    %234 = vmatpush1.msra.mxu0 0.0
    %235 = vmatprep.subr.mxu0 0.0
    %236 = vmatpush1.msra.mxu0 0.0
    %237 = vmatprep.subr.mxu0 0.0
    %238 = vmatpush1.msra.mxu0 0.0
    %239 = vmatprep.subr.mxu0 0.0
    %240 = vmatpush1.msra.mxu0 0.0
    %241 = vmatprep.subr.mxu0 0.0
    %242 = vmatpush1.msra.mxu0 0.0
    %243 = vmatprep.subr.mxu0 0.0
    %244 = vmatpush1.msra.mxu0 0.0
    %245 = vmatprep.subr.mxu0 0.0
    %246 = vmatpush1.msra.mxu0 0.0
    %247 = vmatprep.subr.mxu0 0.0
    %248 = vmatpush1.msra.mxu0 0.0
    %249 = vmatprep.subr.mxu0 0.0
    %250 = vmatpush1.msra.mxu0 0.0
    %251 = vmatprep.subr.mxu0 0.0
    %252 = vmatpush1.msra.mxu0 0.0
    %253 = vmatprep.subr.mxu0 0.0
    %254 = vmatpush1.msra.mxu0 0.0
    %255 = vmatprep.subr.mxu0 0.0
    %256 = vmatpush1.msra.mxu0 0.0
    %257 = vmatprep.subr.mxu0 0.0
    %258 = vmatpush1.msra.mxu0 0.0
    %259 = vmatprep.subr.mxu0 0.0
    %260 = vmatpush1.msra.mxu0 0.0
    %261 = vmatprep.subr.mxu0 0.0
    %262 = vmatpush1.msra.mxu0 0.0
    %263 = vmatprep.subr.mxu0 0.0
    %264 = vmatpush1.msra.mxu0 0.0
    %265 = vmatprep.subr.mxu0 0.0
    %266 = vmatpush1.msra.mxu0 0.0
    %267 = vmatprep.subr.mxu0 0.0
    %268 = vmatpush1.msra.mxu0 0.0
    %269 = vmatprep.mubr.f32.mxu0 0.0
    %270 = vmatmul.mubr.f32.gmra.mrb[0].mxu0 %v110
    %v271 = vpop.f32.mrb[0].mxu0
    %v272 = vadd.f32 %v49, %v271
    %v273 = vpop.f32.mrb[0].mxu0
    %274 = vdwg.mxu0
    %v275 = vmul.f32 %v188, %v272
    %277 = vrot.lane.b32.xlu0 %v275, 64
    %v278 = vpop.permute.xlu0 %277
    %v280 = vadd.f32 %v65, %v278
    %v281 = vtanh.pop %v280
    %v282 = vsub.f32 1.0, %v188
    %284 = vrot.lane.b32.xlu0 %v281, 96
    %v285 = vpop.permute.xlu0 %284
    %v287 = vmul.f32 %v282, %v285
    %v288 = vmul.f32 %v188, 0.0
    %v289 = vadd.f32 %v287, %v288
    %291 = vrot.lane.b32.xlu0 %v289, 96
    %v292 = vpop.permute.xlu0 %291
    %v293 = vsel %vm108, %v292, 0
    %295 = vmatprep.subr.mxu0 0.0
    %296 = vmatpush1.msra.mxu0 %v37
    %297 = vmatprep.subr.mxu0 0.0
    %298 = vmatpush1.msra.mxu0 %v38
    %299 = vmatprep.subr.mxu0 0.0
    %300 = vmatpush1.msra.mxu0 %v39
    %301 = vmatprep.subr.mxu0 0.0
    %302 = vmatpush1.msra.mxu0 %v40
    %303 = vmatprep.subr.mxu0 0.0
    %304 = vmatpush1.msra.mxu0 0.0
    %305 = vmatprep.subr.mxu0 0.0
    %306 = vmatpush1.msra.mxu0 0.0
    %307 = vmatprep.subr.mxu0 0.0
    %308 = vmatpush1.msra.mxu0 0.0
    %309 = vmatprep.subr.mxu0 0.0
    %310 = vmatpush1.msra.mxu0 0.0
    %311 = vmatprep.subr.mxu0 0.0
    %312 = vmatpush1.msra.mxu0 0.0
    %313 = vmatprep.subr.mxu0 0.0
    %314 = vmatpush1.msra.mxu0 0.0
    %315 = vmatprep.subr.mxu0 0.0
    %316 = vmatpush1.msra.mxu0 0.0
    %317 = vmatprep.subr.mxu0 0.0
    %318 = vmatpush1.msra.mxu0 0.0
    %319 = vmatprep.subr.mxu0 0.0
    %320 = vmatpush1.msra.mxu0 0.0
    %321 = vmatprep.subr.mxu0 0.0
    %322 = vmatpush1.msra.mxu0 0.0
    %323 = vmatprep.subr.mxu0 0.0
    %324 = vmatpush1.msra.mxu0 0.0
    %325 = vmatprep.subr.mxu0 0.0
    %326 = vmatpush1.msra.mxu0 0.0
    %327 = vmatprep.subr.mxu0 0.0
    %328 = vmatpush1.msra.mxu0 0.0
    %329 = vmatprep.subr.mxu0 0.0
    %330 = vmatpush1.msra.mxu0 0.0
    %331 = vmatprep.subr.mxu0 0.0
    %332 = vmatpush1.msra.mxu0 0.0
    %333 = vmatprep.subr.mxu0 0.0
    %334 = vmatpush1.msra.mxu0 0.0
    %335 = vmatprep.subr.mxu0 0.0
    %336 = vmatpush1.msra.mxu0 0.0
    %337 = vmatprep.subr.mxu0 0.0
    %338 = vmatpush1.msra.mxu0 0.0
    %339 = vmatprep.subr.mxu0 0.0
    %340 = vmatpush1.msra.mxu0 0.0
    %341 = vmatprep.subr.mxu0 0.0
    %342 = vmatpush1.msra.mxu0 0.0
    %343 = vmatprep.subr.mxu0 0.0
    %344 = vmatpush1.msra.mxu0 0.0
    %345 = vmatprep.subr.mxu0 0.0
    %346 = vmatpush1.msra.mxu0 0.0
    %347 = vmatprep.subr.mxu0 0.0
    %348 = vmatpush1.msra.mxu0 0.0
    %349 = vmatprep.subr.mxu0 0.0
    %350 = vmatpush1.msra.mxu0 0.0
    %351 = vmatprep.subr.mxu0 0.0
    %352 = vmatpush1.msra.mxu0 0.0
    %353 = vmatprep.subr.mxu0 0.0
    %354 = vmatpush1.msra.mxu0 0.0
    %355 = vmatprep.subr.mxu0 0.0
    %356 = vmatpush1.msra.mxu0 0.0
    %357 = vmatprep.subr.mxu0 0.0
    %358 = vmatpush1.msra.mxu0 0.0
    %359 = vmatprep.mubr.f32.mxu0 0.0
    %360 = vmatmul.mubr.f32.gmra.mrb[0].mxu0 %v293
    %v361 = vpop.f32.mrb[0].mxu0
    %v362 = vadd.f32 0.0, %v361
    %v363 = vpop.f32.mrb[0].mxu0
    %364 = vdwg.mxu0
    %v365 = vadd.f32 %v71, %v362
    %v366 = vxor.u32 %v365, 2147483648
    %v367 = vmul.f32 %v366, 1.442695
    %v368 = vpow.pop %v367
    %v369 = vadd.f32 %v368, 1.0
    %v370 = vrcp.pop %v369
    %v371 = vmul.f32 1.0, %v370
    %372 = vmatprep.subr.mxu0 0.0
    %373 = vmatpush1.msra.mxu0 %v194
    %374 = vmatprep.subr.mxu0 0.0
    %375 = vmatpush1.msra.mxu0 %v196
    %376 = vmatprep.subr.mxu0 0.0
    %377 = vmatpush1.msra.mxu0 %v198
    %378 = vmatprep.subr.mxu0 0.0
    %379 = vmatpush1.msra.mxu0 %v200
    %380 = vmatprep.subr.mxu0 0.0
    %381 = vmatpush1.msra.mxu0 0.0
    %382 = vmatprep.subr.mxu0 0.0
    %383 = vmatpush1.msra.mxu0 0.0
    %384 = vmatprep.subr.mxu0 0.0
    %385 = vmatpush1.msra.mxu0 0.0
    %386 = vmatprep.subr.mxu0 0.0
    %387 = vmatpush1.msra.mxu0 0.0
    %388 = vmatprep.subr.mxu0 0.0
    %389 = vmatpush1.msra.mxu0 0.0
    %390 = vmatprep.subr.mxu0 0.0
    %391 = vmatpush1.msra.mxu0 0.0
    %392 = vmatprep.subr.mxu0 0.0
    %393 = vmatpush1.msra.mxu0 0.0
    %394 = vmatprep.subr.mxu0 0.0
    %395 = vmatpush1.msra.mxu0 0.0
    %396 = vmatprep.subr.mxu0 0.0
    %397 = vmatpush1.msra.mxu0 0.0
    %398 = vmatprep.subr.mxu0 0.0
    %399 = vmatpush1.msra.mxu0 0.0
    %400 = vmatprep.subr.mxu0 0.0
    %401 = vmatpush1.msra.mxu0 0.0
    %402 = vmatprep.subr.mxu0 0.0
    %403 = vmatpush1.msra.mxu0 0.0
    %404 = vmatprep.subr.mxu0 0.0
    %405 = vmatpush1.msra.mxu0 0.0
    %406 = vmatprep.subr.mxu0 0.0
    %407 = vmatpush1.msra.mxu0 0.0
    %408 = vmatprep.subr.mxu0 0.0
    %409 = vmatpush1.msra.mxu0 0.0
    %410 = vmatprep.subr.mxu0 0.0
    %411 = vmatpush1.msra.mxu0 0.0
    %412 = vmatprep.subr.mxu0 0.0
    %413 = vmatpush1.msra.mxu0 0.0
    %414 = vmatprep.subr.mxu0 0.0
    %415 = vmatpush1.msra.mxu0 0.0
    %416 = vmatprep.subr.mxu0 0.0
    %417 = vmatpush1.msra.mxu0 0.0
    %418 = vmatprep.subr.mxu0 0.0
    %419 = vmatpush1.msra.mxu0 0.0
    %420 = vmatprep.subr.mxu0 0.0
    %421 = vmatpush1.msra.mxu0 0.0
    %422 = vmatprep.subr.mxu0 0.0
    %423 = vmatpush1.msra.mxu0 0.0
    %424 = vmatprep.subr.mxu0 0.0
    %425 = vmatpush1.msra.mxu0 0.0
    %426 = vmatprep.subr.mxu0 0.0
    %427 = vmatpush1.msra.mxu0 0.0
    %428 = vmatprep.subr.mxu0 0.0
    %429 = vmatpush1.msra.mxu0 0.0
    %430 = vmatprep.subr.mxu0 0.0
    %431 = vmatpush1.msra.mxu0 0.0
    %432 = vmatprep.subr.mxu0 0.0
    %433 = vmatpush1.msra.mxu0 0.0
    %434 = vmatprep.subr.mxu0 0.0
    %435 = vmatpush1.msra.mxu0 0.0
    %436 = vmatprep.mubr.f32.mxu0 0.0
    %437 = vmatmul.mubr.f32.gmra.mrb[0].mxu0 %v293
    %v438 = vpop.f32.mrb[0].mxu0
    %v439 = vadd.f32 %v49, %v438
    %v440 = vpop.f32.mrb[0].mxu0
    %441 = vdwg.mxu0
    %v442 = vmul.f32 %v371, %v439
    %444 = vrot.lane.b32.xlu0 %v442, 64
    %v445 = vpop.permute.xlu0 %444
    %v447 = vadd.f32 %v71, %v445
    %v448 = vtanh.pop %v447
    %v449 = vsub.f32 1.0, %v371
    %451 = vrot.lane.b32.xlu0 %v448, 96
    %v452 = vpop.permute.xlu0 %451
    %v454 = vmul.f32 %v449, %v452
    %v455 = vmul.f32 %v371, %v289
    %v456 = vadd.f32 %v454, %v455
    %458 = vrot.lane.b32.xlu0 %v456, 96
    %v459 = vpop.permute.xlu0 %458
    %v460 = vsel %vm108, %v459, 0
    %462 = vmatprep.subr.mxu0 0.0
    %463 = vmatpush1.msra.mxu0 %v37
    %464 = vmatprep.subr.mxu0 0.0
    %465 = vmatpush1.msra.mxu0 %v38
    %466 = vmatprep.subr.mxu0 0.0
    %467 = vmatpush1.msra.mxu0 %v39
    %468 = vmatprep.subr.mxu0 0.0
    %469 = vmatpush1.msra.mxu0 %v40
    %470 = vmatprep.subr.mxu0 0.0
    %471 = vmatpush1.msra.mxu0 0.0
    %472 = vmatprep.subr.mxu0 0.0
    %473 = vmatpush1.msra.mxu0 0.0
    %474 = vmatprep.subr.mxu0 0.0
    %475 = vmatpush1.msra.mxu0 0.0
    %476 = vmatprep.subr.mxu0 0.0
    %477 = vmatpush1.msra.mxu0 0.0
    %478 = vmatprep.subr.mxu0 0.0
    %479 = vmatpush1.msra.mxu0 0.0
    %480 = vmatprep.subr.mxu0 0.0
    %481 = vmatpush1.msra.mxu0 0.0
    %482 = vmatprep.subr.mxu0 0.0
    %483 = vmatpush1.msra.mxu0 0.0
    %484 = vmatprep.subr.mxu0 0.0
    %485 = vmatpush1.msra.mxu0 0.0
    %486 = vmatprep.subr.mxu0 0.0
    %487 = vmatpush1.msra.mxu0 0.0
    %488 = vmatprep.subr.mxu0 0.0
    %489 = vmatpush1.msra.mxu0 0.0
    %490 = vmatprep.subr.mxu0 0.0
    %491 = vmatpush1.msra.mxu0 0.0
    %492 = vmatprep.subr.mxu0 0.0
    %493 = vmatpush1.msra.mxu0 0.0
    %494 = vmatprep.subr.mxu0 0.0
    %495 = vmatpush1.msra.mxu0 0.0
    %496 = vmatprep.subr.mxu0 0.0
    %497 = vmatpush1.msra.mxu0 0.0
    %498 = vmatprep.subr.mxu0 0.0
    %499 = vmatpush1.msra.mxu0 0.0
    %500 = vmatprep.subr.mxu0 0.0
    %501 = vmatpush1.msra.mxu0 0.0
    %502 = vmatprep.subr.mxu0 0.0
    %503 = vmatpush1.msra.mxu0 0.0
    %504 = vmatprep.subr.mxu0 0.0
    %505 = vmatpush1.msra.mxu0 0.0
    %506 = vmatprep.subr.mxu0 0.0
    %507 = vmatpush1.msra.mxu0 0.0
    %508 = vmatprep.subr.mxu0 0.0
    %509 = vmatpush1.msra.mxu0 0.0
    %510 = vmatprep.subr.mxu0 0.0
    %511 = vmatpush1.msra.mxu0 0.0
    %512 = vmatprep.subr.mxu0 0.0
    %513 = vmatpush1.msra.mxu0 0.0
    %514 = vmatprep.subr.mxu0 0.0
    %515 = vmatpush1.msra.mxu0 0.0
    %516 = vmatprep.subr.mxu0 0.0
    %517 = vmatpush1.msra.mxu0 0.0
    %518 = vmatprep.subr.mxu0 0.0
    %519 = vmatpush1.msra.mxu0 0.0
    %520 = vmatprep.subr.mxu0 0.0
    %521 = vmatpush1.msra.mxu0 0.0
    %522 = vmatprep.subr.mxu0 0.0
    %523 = vmatpush1.msra.mxu0 0.0
    %524 = vmatprep.subr.mxu0 0.0
    %525 = vmatpush1.msra.mxu0 0.0
    %526 = vmatprep.mubr.f32.mxu0 0.0
    %527 = vmatmul.mubr.f32.gmra.mrb[0].mxu0 %v460
    %v528 = vpop.f32.mrb[0].mxu0
    %v529 = vadd.f32 0.0, %v528
    %v530 = vpop.f32.mrb[0].mxu0
    %531 = vdwg.mxu0
    %v532 = vadd.f32 %v77, %v529
    %v533 = vxor.u32 %v532, 2147483648
    %v534 = vmul.f32 %v533, 1.442695
    %v535 = vpow.pop %v534
    %v536 = vadd.f32 %v535, 1.0
    %v537 = vrcp.pop %v536
    %v538 = vmul.f32 1.0, %v537
    %539 = vmatprep.subr.mxu0 0.0
    %540 = vmatpush1.msra.mxu0 %v194
    %541 = vmatprep.subr.mxu0 0.0
    %542 = vmatpush1.msra.mxu0 %v196
    %543 = vmatprep.subr.mxu0 0.0
    %544 = vmatpush1.msra.mxu0 %v198
    %545 = vmatprep.subr.mxu0 0.0
    %546 = vmatpush1.msra.mxu0 %v200
    %547 = vmatprep.subr.mxu0 0.0
    %548 = vmatpush1.msra.mxu0 0.0
    %549 = vmatprep.subr.mxu0 0.0
    %550 = vmatpush1.msra.mxu0 0.0
    %551 = vmatprep.subr.mxu0 0.0
    %552 = vmatpush1.msra.mxu0 0.0
    %553 = vmatprep.subr.mxu0 0.0
    %554 = vmatpush1.msra.mxu0 0.0
    %555 = vmatprep.subr.mxu0 0.0
    %556 = vmatpush1.msra.mxu0 0.0
    %557 = vmatprep.subr.mxu0 0.0
    %558 = vmatpush1.msra.mxu0 0.0
    %559 = vmatprep.subr.mxu0 0.0
    %560 = vmatpush1.msra.mxu0 0.0
    %561 = vmatprep.subr.mxu0 0.0
    %562 = vmatpush1.msra.mxu0 0.0
    %563 = vmatprep.subr.mxu0 0.0
    %564 = vmatpush1.msra.mxu0 0.0
    %565 = vmatprep.subr.mxu0 0.0
    %566 = vmatpush1.msra.mxu0 0.0
    %567 = vmatprep.subr.mxu0 0.0
    %568 = vmatpush1.msra.mxu0 0.0
    %569 = vmatprep.subr.mxu0 0.0
    %570 = vmatpush1.msra.mxu0 0.0
    %571 = vmatprep.subr.mxu0 0.0
    %572 = vmatpush1.msra.mxu0 0.0
    %573 = vmatprep.subr.mxu0 0.0
    %574 = vmatpush1.msra.mxu0 0.0
    %575 = vmatprep.subr.mxu0 0.0
    %576 = vmatpush1.msra.mxu0 0.0
    %577 = vmatprep.subr.mxu0 0.0
    %578 = vmatpush1.msra.mxu0 0.0
    %579 = vmatprep.subr.mxu0 0.0
    %580 = vmatpush1.msra.mxu0 0.0
    %581 = vmatprep.subr.mxu0 0.0
    %582 = vmatpush1.msra.mxu0 0.0
    %583 = vmatprep.subr.mxu0 0.0
    %584 = vmatpush1.msra.mxu0 0.0
    %585 = vmatprep.subr.mxu0 0.0
    %586 = vmatpush1.msra.mxu0 0.0
    %587 = vmatprep.subr.mxu0 0.0
    %588 = vmatpush1.msra.mxu0 0.0
    %589 = vmatprep.subr.mxu0 0.0
    %590 = vmatpush1.msra.mxu0 0.0
    %591 = vmatprep.subr.mxu0 0.0
    %592 = vmatpush1.msra.mxu0 0.0
    %593 = vmatprep.subr.mxu0 0.0
    %594 = vmatpush1.msra.mxu0 0.0
    %595 = vmatprep.subr.mxu0 0.0
    %596 = vmatpush1.msra.mxu0 0.0
    %597 = vmatprep.subr.mxu0 0.0
    %598 = vmatpush1.msra.mxu0 0.0
    %599 = vmatprep.subr.mxu0 0.0
    %600 = vmatpush1.msra.mxu0 0.0
    %601 = vmatprep.subr.mxu0 0.0
    %602 = vmatpush1.msra.mxu0 0.0
    %603 = vmatprep.mubr.f32.mxu0 0.0
    %604 = vmatmul.mubr.f32.gmra.mrb[0].mxu0 %v460
    %v605 = vpop.f32.mrb[0].mxu0
    %v606 = vadd.f32 %v49, %v605
    %v607 = vpop.f32.mrb[0].mxu0
    %608 = vdwg.mxu0
    %v609 = vmul.f32 %v538, %v606
    %611 = vrot.lane.b32.xlu0 %v609, 64
    %v612 = vpop.permute.xlu0 %611
    %v614 = vadd.f32 %v77, %v612
    %v615 = vtanh.pop %v614
    %v616 = vsub.f32 1.0, %v538
    %618 = vrot.lane.b32.xlu0 %v615, 96
    %v619 = vpop.permute.xlu0 %618
    %v621 = vmul.f32 %v616, %v619
    %v622 = vmul.f32 %v538, %v456
    %v623 = vadd.f32 %v621, %v622
    %625 = vrot.lane.b32.xlu0 %v623, 96
    %v626 = vpop.permute.xlu0 %625
    %v627 = vsel %vm108, %v626, 0
    %629 = vmatprep.subr.mxu0 0.0
    %630 = vmatpush1.msra.mxu0 %v37
    %631 = vmatprep.subr.mxu0 0.0
    %632 = vmatpush1.msra.mxu0 %v38
    %633 = vmatprep.subr.mxu0 0.0
    %634 = vmatpush1.msra.mxu0 %v39
    %635 = vmatprep.subr.mxu0 0.0
    %636 = vmatpush1.msra.mxu0 %v40
    %637 = vmatprep.subr.mxu0 0.0
    %638 = vmatpush1.msra.mxu0 0.0
    %639 = vmatprep.subr.mxu0 0.0
    %640 = vmatpush1.msra.mxu0 0.0
    %641 = vmatprep.subr.mxu0 0.0
    %642 = vmatpush1.msra.mxu0 0.0
    %643 = vmatprep.subr.mxu0 0.0
    %644 = vmatpush1.msra.mxu0 0.0
    %645 = vmatprep.subr.mxu0 0.0
    %646 = vmatpush1.msra.mxu0 0.0
    %647 = vmatprep.subr.mxu0 0.0
    %648 = vmatpush1.msra.mxu0 0.0
    %649 = vmatprep.subr.mxu0 0.0
    %650 = vmatpush1.msra.mxu0 0.0
    %651 = vmatprep.subr.mxu0 0.0
    %652 = vmatpush1.msra.mxu0 0.0
    %653 = vmatprep.subr.mxu0 0.0
    %654 = vmatpush1.msra.mxu0 0.0
    %655 = vmatprep.subr.mxu0 0.0
    %656 = vmatpush1.msra.mxu0 0.0
    %657 = vmatprep.subr.mxu0 0.0
    %658 = vmatpush1.msra.mxu0 0.0
    %659 = vmatprep.subr.mxu0 0.0
    %660 = vmatpush1.msra.mxu0 0.0
    %661 = vmatprep.subr.mxu0 0.0
    %662 = vmatpush1.msra.mxu0 0.0
    %663 = vmatprep.subr.mxu0 0.0
    %664 = vmatpush1.msra.mxu0 0.0
    %665 = vmatprep.subr.mxu0 0.0
    %666 = vmatpush1.msra.mxu0 0.0
    %667 = vmatprep.subr.mxu0 0.0
    %668 = vmatpush1.msra.mxu0 0.0
    %669 = vmatprep.subr.mxu0 0.0
    %670 = vmatpush1.msra.mxu0 0.0
    %671 = vmatprep.subr.mxu0 0.0
    %672 = vmatpush1.msra.mxu0 0.0
    %673 = vmatprep.subr.mxu0 0.0
    %674 = vmatpush1.msra.mxu0 0.0
    %675 = vmatprep.subr.mxu0 0.0
    %676 = vmatpush1.msra.mxu0 0.0
    %677 = vmatprep.subr.mxu0 0.0
    %678 = vmatpush1.msra.mxu0 0.0
    %679 = vmatprep.subr.mxu0 0.0
    %680 = vmatpush1.msra.mxu0 0.0
    %681 = vmatprep.subr.mxu0 0.0
    %682 = vmatpush1.msra.mxu0 0.0
    %683 = vmatprep.subr.mxu0 0.0
    %684 = vmatpush1.msra.mxu0 0.0
    %685 = vmatprep.subr.mxu0 0.0
    %686 = vmatpush1.msra.mxu0 0.0
    %687 = vmatprep.subr.mxu0 0.0
    %688 = vmatpush1.msra.mxu0 0.0
    %689 = vmatprep.subr.mxu0 0.0
    %690 = vmatpush1.msra.mxu0 0.0
    %691 = vmatprep.subr.mxu0 0.0
    %692 = vmatpush1.msra.mxu0 0.0
    %693 = vmatprep.mubr.f32.mxu0 0.0
    %694 = vmatmul.mubr.f32.gmra.mrb[0].mxu0 %v627
    %v695 = vpop.f32.mrb[0].mxu0
    %v696 = vadd.f32 0.0, %v695
    %v697 = vpop.f32.mrb[0].mxu0
    %698 = vdwg.mxu0
    %v699 = vadd.f32 %v83, %v696
    %v700 = vxor.u32 %v699, 2147483648
    %v701 = vmul.f32 %v700, 1.442695
    %v702 = vpow.pop %v701
    %v703 = vadd.f32 %v702, 1.0
    %v704 = vrcp.pop %v703
    %v705 = vmul.f32 1.0, %v704
    %706 = vmatprep.subr.mxu0 0.0
    %707 = vmatpush1.msra.mxu0 %v194
    %708 = vmatprep.subr.mxu0 0.0
    %709 = vmatpush1.msra.mxu0 %v196
    %710 = vmatprep.subr.mxu0 0.0
    %711 = vmatpush1.msra.mxu0 %v198
    %712 = vmatprep.subr.mxu0 0.0
    %713 = vmatpush1.msra.mxu0 %v200
    %714 = vmatprep.subr.mxu0 0.0
    %715 = vmatpush1.msra.mxu0 0.0
    %716 = vmatprep.subr.mxu0 0.0
    %717 = vmatpush1.msra.mxu0 0.0
    %718 = vmatprep.subr.mxu0 0.0
    %719 = vmatpush1.msra.mxu0 0.0
    %720 = vmatprep.subr.mxu0 0.0
    %721 = vmatpush1.msra.mxu0 0.0
    %722 = vmatprep.subr.mxu0 0.0
    %723 = vmatpush1.msra.mxu0 0.0
    %724 = vmatprep.subr.mxu0 0.0
    %725 = vmatpush1.msra.mxu0 0.0
    %726 = vmatprep.subr.mxu0 0.0
    %727 = vmatpush1.msra.mxu0 0.0
    %728 = vmatprep.subr.mxu0 0.0
    %729 = vmatpush1.msra.mxu0 0.0
    %730 = vmatprep.subr.mxu0 0.0
    %731 = vmatpush1.msra.mxu0 0.0
    %732 = vmatprep.subr.mxu0 0.0
    %733 = vmatpush1.msra.mxu0 0.0
    %734 = vmatprep.subr.mxu0 0.0
    %735 = vmatpush1.msra.mxu0 0.0
    %736 = vmatprep.subr.mxu0 0.0
    %737 = vmatpush1.msra.mxu0 0.0
    %738 = vmatprep.subr.mxu0 0.0
    %739 = vmatpush1.msra.mxu0 0.0
    %740 = vmatprep.subr.mxu0 0.0
    %741 = vmatpush1.msra.mxu0 0.0
    %742 = vmatprep.subr.mxu0 0.0
    %743 = vmatpush1.msra.mxu0 0.0
    %744 = vmatprep.subr.mxu0 0.0
    %745 = vmatpush1.msra.mxu0 0.0
    %746 = vmatprep.subr.mxu0 0.0
    %747 = vmatpush1.msra.mxu0 0.0
    %748 = vmatprep.subr.mxu0 0.0
    %749 = vmatpush1.msra.mxu0 0.0
    %750 = vmatprep.subr.mxu0 0.0
    %751 = vmatpush1.msra.mxu0 0.0
    %752 = vmatprep.subr.mxu0 0.0
    %753 = vmatpush1.msra.mxu0 0.0
    %754 = vmatprep.subr.mxu0 0.0
    %755 = vmatpush1.msra.mxu0 0.0
    %756 = vmatprep.subr.mxu0 0.0
    %757 = vmatpush1.msra.mxu0 0.0
    %758 = vmatprep.subr.mxu0 0.0
    %759 = vmatpush1.msra.mxu0 0.0
    %760 = vmatprep.subr.mxu0 0.0
    %761 = vmatpush1.msra.mxu0 0.0
    %762 = vmatprep.subr.mxu0 0.0
    %763 = vmatpush1.msra.mxu0 0.0
    %764 = vmatprep.subr.mxu0 0.0
    %765 = vmatpush1.msra.mxu0 0.0
    %766 = vmatprep.subr.mxu0 0.0
    %767 = vmatpush1.msra.mxu0 0.0
    %768 = vmatprep.subr.mxu0 0.0
    %769 = vmatpush1.msra.mxu0 0.0
    %770 = vmatprep.mubr.f32.mxu0 0.0
    %771 = vmatmul.mubr.f32.gmra.mrb[0].mxu0 %v627
    %v772 = vpop.f32.mrb[0].mxu0
    %v773 = vadd.f32 %v49, %v772
    %v774 = vpop.f32.mrb[0].mxu0
    %775 = vdwg.mxu0
    %v776 = vmul.f32 %v705, %v773
    %778 = vrot.lane.b32.xlu0 %v776, 64
    %v779 = vpop.permute.xlu0 %778
    %v781 = vadd.f32 %v83, %v779
    %v782 = vtanh.pop %v781
    %v783 = vsub.f32 1.0, %v705
    %785 = vrot.lane.b32.xlu0 %v782, 96
    %v786 = vpop.permute.xlu0 %785
    %v788 = vmul.f32 %v783, %v786
    %v789 = vmul.f32 %v705, %v623
    %v790 = vadd.f32 %v788, %v789
    %792 = vrot.lane.b32.xlu0 %v790, 96
    %v793 = vpop.permute.xlu0 %792
    %v794 = vsel %vm108, %v793, 0
    %796 = vmatprep.subr.mxu0 0.0
    %797 = vmatpush1.msra.mxu0 %v37
    %798 = vmatprep.subr.mxu0 0.0
    %799 = vmatpush1.msra.mxu0 %v38
    %800 = vmatprep.subr.mxu0 0.0
    %801 = vmatpush1.msra.mxu0 %v39
    %802 = vmatprep.subr.mxu0 0.0
    %803 = vmatpush1.msra.mxu0 %v40
    %804 = vmatprep.subr.mxu0 0.0
    %805 = vmatpush1.msra.mxu0 0.0
    %806 = vmatprep.subr.mxu0 0.0
    %807 = vmatpush1.msra.mxu0 0.0
    %808 = vmatprep.subr.mxu0 0.0
    %809 = vmatpush1.msra.mxu0 0.0
    %810 = vmatprep.subr.mxu0 0.0
    %811 = vmatpush1.msra.mxu0 0.0
    %812 = vmatprep.subr.mxu0 0.0
    %813 = vmatpush1.msra.mxu0 0.0
    %814 = vmatprep.subr.mxu0 0.0
    %815 = vmatpush1.msra.mxu0 0.0
    %816 = vmatprep.subr.mxu0 0.0
    %817 = vmatpush1.msra.mxu0 0.0
    %818 = vmatprep.subr.mxu0 0.0
    %819 = vmatpush1.msra.mxu0 0.0
    %820 = vmatprep.subr.mxu0 0.0
    %821 = vmatpush1.msra.mxu0 0.0
    %822 = vmatprep.subr.mxu0 0.0
    %823 = vmatpush1.msra.mxu0 0.0
    %824 = vmatprep.subr.mxu0 0.0
    %825 = vmatpush1.msra.mxu0 0.0
    %826 = vmatprep.subr.mxu0 0.0
    %827 = vmatpush1.msra.mxu0 0.0
    %828 = vmatprep.subr.mxu0 0.0
    %829 = vmatpush1.msra.mxu0 0.0
    %830 = vmatprep.subr.mxu0 0.0
    %831 = vmatpush1.msra.mxu0 0.0
    %832 = vmatprep.subr.mxu0 0.0
    %833 = vmatpush1.msra.mxu0 0.0
    %834 = vmatprep.subr.mxu0 0.0
    %835 = vmatpush1.msra.mxu0 0.0
    %836 = vmatprep.subr.mxu0 0.0
    %837 = vmatpush1.msra.mxu0 0.0
    %838 = vmatprep.subr.mxu0 0.0
    %839 = vmatpush1.msra.mxu0 0.0
    %840 = vmatprep.subr.mxu0 0.0
    %841 = vmatpush1.msra.mxu0 0.0
    %842 = vmatprep.subr.mxu0 0.0
    %843 = vmatpush1.msra.mxu0 0.0
    %844 = vmatprep.subr.mxu0 0.0
    %845 = vmatpush1.msra.mxu0 0.0
    %846 = vmatprep.subr.mxu0 0.0
    %847 = vmatpush1.msra.mxu0 0.0
    %848 = vmatprep.subr.mxu0 0.0
    %849 = vmatpush1.msra.mxu0 0.0
    %850 = vmatprep.subr.mxu0 0.0
    %851 = vmatpush1.msra.mxu0 0.0
    %852 = vmatprep.subr.mxu0 0.0
    %853 = vmatpush1.msra.mxu0 0.0
    %854 = vmatprep.subr.mxu0 0.0
    %855 = vmatpush1.msra.mxu0 0.0
    %856 = vmatprep.subr.mxu0 0.0
    %857 = vmatpush1.msra.mxu0 0.0
    %858 = vmatprep.subr.mxu0 0.0
    %859 = vmatpush1.msra.mxu0 0.0
    %860 = vmatprep.mubr.f32.mxu0 0.0
    %861 = vmatmul.mubr.f32.gmra.mrb[0].mxu0 %v794
    %v862 = vpop.f32.mrb[0].mxu0
    %v863 = vadd.f32 0.0, %v862
    %v864 = vpop.f32.mrb[0].mxu0
    %865 = vdwg.mxu0
    %v866 = vadd.f32 %v89, %v863
    %v867 = vxor.u32 %v866, 2147483648
    %v868 = vmul.f32 %v867, 1.442695
    %v869 = vpow.pop %v868
    %v870 = vadd.f32 %v869, 1.0
    %v871 = vrcp.pop %v870
    %v872 = vmul.f32 1.0, %v871
    %873 = vmatprep.subr.mxu0 0.0
    %874 = vmatpush1.msra.mxu0 %v194
    %875 = vmatprep.subr.mxu0 0.0
    %876 = vmatpush1.msra.mxu0 %v196
    %877 = vmatprep.subr.mxu0 0.0
    %878 = vmatpush1.msra.mxu0 %v198
    %879 = vmatprep.subr.mxu0 0.0
    %880 = vmatpush1.msra.mxu0 %v200
    %881 = vmatprep.subr.mxu0 0.0
    %882 = vmatpush1.msra.mxu0 0.0
    %883 = vmatprep.subr.mxu0 0.0
    %884 = vmatpush1.msra.mxu0 0.0
    %885 = vmatprep.subr.mxu0 0.0
    %886 = vmatpush1.msra.mxu0 0.0
    %887 = vmatprep.subr.mxu0 0.0
    %888 = vmatpush1.msra.mxu0 0.0
    %889 = vmatprep.subr.mxu0 0.0
    %890 = vmatpush1.msra.mxu0 0.0
    %891 = vmatprep.subr.mxu0 0.0
    %892 = vmatpush1.msra.mxu0 0.0
    %893 = vmatprep.subr.mxu0 0.0
    %894 = vmatpush1.msra.mxu0 0.0
    %895 = vmatprep.subr.mxu0 0.0
    %896 = vmatpush1.msra.mxu0 0.0
    %897 = vmatprep.subr.mxu0 0.0
    %898 = vmatpush1.msra.mxu0 0.0
    %899 = vmatprep.subr.mxu0 0.0
    %900 = vmatpush1.msra.mxu0 0.0
    %901 = vmatprep.subr.mxu0 0.0
    %902 = vmatpush1.msra.mxu0 0.0
    %903 = vmatprep.subr.mxu0 0.0
    %904 = vmatpush1.msra.mxu0 0.0
    %905 = vmatprep.subr.mxu0 0.0
    %906 = vmatpush1.msra.mxu0 0.0
    %907 = vmatprep.subr.mxu0 0.0
    %908 = vmatpush1.msra.mxu0 0.0
    %909 = vmatprep.subr.mxu0 0.0
    %910 = vmatpush1.msra.mxu0 0.0
    %911 = vmatprep.subr.mxu0 0.0
    %912 = vmatpush1.msra.mxu0 0.0
    %913 = vmatprep.subr.mxu0 0.0
    %914 = vmatpush1.msra.mxu0 0.0
    %915 = vmatprep.subr.mxu0 0.0
    %916 = vmatpush1.msra.mxu0 0.0
    %917 = vmatprep.subr.mxu0 0.0
    %918 = vmatpush1.msra.mxu0 0.0
    %919 = vmatprep.subr.mxu0 0.0
    %920 = vmatpush1.msra.mxu0 0.0
    %921 = vmatprep.subr.mxu0 0.0
    %922 = vmatpush1.msra.mxu0 0.0
    %923 = vmatprep.subr.mxu0 0.0
    %924 = vmatpush1.msra.mxu0 0.0
    %925 = vmatprep.subr.mxu0 0.0
    %926 = vmatpush1.msra.mxu0 0.0
    %927 = vmatprep.subr.mxu0 0.0
    %928 = vmatpush1.msra.mxu0 0.0
    %929 = vmatprep.subr.mxu0 0.0
    %930 = vmatpush1.msra.mxu0 0.0
    %931 = vmatprep.subr.mxu0 0.0
    %932 = vmatpush1.msra.mxu0 0.0
    %933 = vmatprep.subr.mxu0 0.0
    %934 = vmatpush1.msra.mxu0 0.0
    %935 = vmatprep.subr.mxu0 0.0
    %936 = vmatpush1.msra.mxu0 0.0
    %937 = vmatprep.mubr.f32.mxu0 0.0
    %938 = vmatmul.mubr.f32.gmra.mrb[0].mxu0 %v794
    %v939 = vpop.f32.mrb[0].mxu0
    %v940 = vadd.f32 %v49, %v939
    %v941 = vpop.f32.mrb[0].mxu0
    %942 = vdwg.mxu0
    %v943 = vmul.f32 %v872, %v940
    %945 = vrot.lane.b32.xlu0 %v943, 64
    %v946 = vpop.permute.xlu0 %945
    %v948 = vadd.f32 %v89, %v946
    %v949 = vtanh.pop %v948
    %v950 = vsub.f32 1.0, %v872
    %952 = vrot.lane.b32.xlu0 %v949, 96
    %v953 = vpop.permute.xlu0 %952
    %v955 = vmul.f32 %v950, %v953
    %v956 = vmul.f32 %v872, %v790
    %v957 = vadd.f32 %v955, %v956
    %959 = vrot.lane.b32.xlu0 %v957, 96
    %v960 = vpop.permute.xlu0 %959
    %v961 = vsel %vm108, %v960, 0
    %963 = vmatprep.subr.mxu0 0.0
    %964 = vmatpush1.msra.mxu0 %v37
    %965 = vmatprep.subr.mxu0 0.0
    %966 = vmatpush1.msra.mxu0 %v38
    %967 = vmatprep.subr.mxu0 0.0
    %968 = vmatpush1.msra.mxu0 %v39
    %969 = vmatprep.subr.mxu0 0.0
    %970 = vmatpush1.msra.mxu0 %v40
    %971 = vmatprep.subr.mxu0 0.0
    %972 = vmatpush1.msra.mxu0 0.0
    %973 = vmatprep.subr.mxu0 0.0
    %974 = vmatpush1.msra.mxu0 0.0
    %975 = vmatprep.subr.mxu0 0.0
    %976 = vmatpush1.msra.mxu0 0.0
    %977 = vmatprep.subr.mxu0 0.0
    %978 = vmatpush1.msra.mxu0 0.0
    %979 = vmatprep.subr.mxu0 0.0
    %980 = vmatpush1.msra.mxu0 0.0
    %981 = vmatprep.subr.mxu0 0.0
    %982 = vmatpush1.msra.mxu0 0.0
    %983 = vmatprep.subr.mxu0 0.0
    %984 = vmatpush1.msra.mxu0 0.0
    %985 = vmatprep.subr.mxu0 0.0
    %986 = vmatpush1.msra.mxu0 0.0
    %987 = vmatprep.subr.mxu0 0.0
    %988 = vmatpush1.msra.mxu0 0.0
    %989 = vmatprep.subr.mxu0 0.0
    %990 = vmatpush1.msra.mxu0 0.0
    %991 = vmatprep.subr.mxu0 0.0
    %992 = vmatpush1.msra.mxu0 0.0
    %993 = vmatprep.subr.mxu0 0.0
    %994 = vmatpush1.msra.mxu0 0.0
    %995 = vmatprep.subr.mxu0 0.0
    %996 = vmatpush1.msra.mxu0 0.0
    %997 = vmatprep.subr.mxu0 0.0
    %998 = vmatpush1.msra.mxu0 0.0
    %999 = vmatprep.subr.mxu0 0.0
    %1000 = vmatpush1.msra.mxu0 0.0
    %1001 = vmatprep.subr.mxu0 0.0
    %1002 = vmatpush1.msra.mxu0 0.0
    %1003 = vmatprep.subr.mxu0 0.0
    %1004 = vmatpush1.msra.mxu0 0.0
    %1005 = vmatprep.subr.mxu0 0.0
    %1006 = vmatpush1.msra.mxu0 0.0
    %1007 = vmatprep.subr.mxu0 0.0
    %1008 = vmatpush1.msra.mxu0 0.0
    %1009 = vmatprep.subr.mxu0 0.0
    %1010 = vmatpush1.msra.mxu0 0.0
    %1011 = vmatprep.subr.mxu0 0.0
    %1012 = vmatpush1.msra.mxu0 0.0
    %1013 = vmatprep.subr.mxu0 0.0
    %1014 = vmatpush1.msra.mxu0 0.0
    %1015 = vmatprep.subr.mxu0 0.0
    %1016 = vmatpush1.msra.mxu0 0.0
    %1017 = vmatprep.subr.mxu0 0.0
    %1018 = vmatpush1.msra.mxu0 0.0
    %1019 = vmatprep.subr.mxu0 0.0
    %1020 = vmatpush1.msra.mxu0 0.0
    %1021 = vmatprep.subr.mxu0 0.0
    %1022 = vmatpush1.msra.mxu0 0.0
    %1023 = vmatprep.subr.mxu0 0.0
    %1024 = vmatpush1.msra.mxu0 0.0
    %1025 = vmatprep.subr.mxu0 0.0
    %1026 = vmatpush1.msra.mxu0 0.0
    %1027 = vmatprep.mubr.f32.mxu0 0.0
    %1028 = vmatmul.mubr.f32.gmra.mrb[0].mxu0 %v961
    %v1029 = vpop.f32.mrb[0].mxu0
    %v1030 = vadd.f32 0.0, %v1029
    %v1031 = vpop.f32.mrb[0].mxu0
    %1032 = vdwg.mxu0
    %v1033 = vadd.f32 %v95, %v1030
    %v1034 = vxor.u32 %v1033, 2147483648
    %v1035 = vmul.f32 %v1034, 1.442695
    %v1036 = vpow.pop %v1035
    %v1037 = vadd.f32 %v1036, 1.0
    %v1038 = vrcp.pop %v1037
    %v1039 = vmul.f32 1.0, %v1038
    %1040 = vmatprep.subr.mxu0 0.0
    %1041 = vmatpush1.msra.mxu0 %v194
    %1042 = vmatprep.subr.mxu0 0.0
    %1043 = vmatpush1.msra.mxu0 %v196
    %1044 = vmatprep.subr.mxu0 0.0
    %1045 = vmatpush1.msra.mxu0 %v198
    %1046 = vmatprep.subr.mxu0 0.0
    %1047 = vmatpush1.msra.mxu0 %v200
    %1048 = vmatprep.subr.mxu0 0.0
    %1049 = vmatpush1.msra.mxu0 0.0
    %1050 = vmatprep.subr.mxu0 0.0
    %1051 = vmatpush1.msra.mxu0 0.0
    %1052 = vmatprep.subr.mxu0 0.0
    %1053 = vmatpush1.msra.mxu0 0.0
    %1054 = vmatprep.subr.mxu0 0.0
    %1055 = vmatpush1.msra.mxu0 0.0
    %1056 = vmatprep.subr.mxu0 0.0
    %1057 = vmatpush1.msra.mxu0 0.0
    %1058 = vmatprep.subr.mxu0 0.0
    %1059 = vmatpush1.msra.mxu0 0.0
    %1060 = vmatprep.subr.mxu0 0.0
    %1061 = vmatpush1.msra.mxu0 0.0
    %1062 = vmatprep.subr.mxu0 0.0
    %1063 = vmatpush1.msra.mxu0 0.0
    %1064 = vmatprep.subr.mxu0 0.0
    %1065 = vmatpush1.msra.mxu0 0.0
    %1066 = vmatprep.subr.mxu0 0.0
    %1067 = vmatpush1.msra.mxu0 0.0
    %1068 = vmatprep.subr.mxu0 0.0
    %1069 = vmatpush1.msra.mxu0 0.0
    %1070 = vmatprep.subr.mxu0 0.0
    %1071 = vmatpush1.msra.mxu0 0.0
    %1072 = vmatprep.subr.mxu0 0.0
    %1073 = vmatpush1.msra.mxu0 0.0
    %1074 = vmatprep.subr.mxu0 0.0
    %1075 = vmatpush1.msra.mxu0 0.0
    %1076 = vmatprep.subr.mxu0 0.0
    %1077 = vmatpush1.msra.mxu0 0.0
    %1078 = vmatprep.subr.mxu0 0.0
    %1079 = vmatpush1.msra.mxu0 0.0
    %1080 = vmatprep.subr.mxu0 0.0
    %1081 = vmatpush1.msra.mxu0 0.0
    %1082 = vmatprep.subr.mxu0 0.0
    %1083 = vmatpush1.msra.mxu0 0.0
    %1084 = vmatprep.subr.mxu0 0.0
    %1085 = vmatpush1.msra.mxu0 0.0
    %1086 = vmatprep.subr.mxu0 0.0
    %1087 = vmatpush1.msra.mxu0 0.0
    %1088 = vmatprep.subr.mxu0 0.0
    %1089 = vmatpush1.msra.mxu0 0.0
    %1090 = vmatprep.subr.mxu0 0.0
    %1091 = vmatpush1.msra.mxu0 0.0
    %1092 = vmatprep.subr.mxu0 0.0
    %1093 = vmatpush1.msra.mxu0 0.0
    %1094 = vmatprep.subr.mxu0 0.0
    %1095 = vmatpush1.msra.mxu0 0.0
    %1096 = vmatprep.subr.mxu0 0.0
    %1097 = vmatpush1.msra.mxu0 0.0
    %1098 = vmatprep.subr.mxu0 0.0
    %1099 = vmatpush1.msra.mxu0 0.0
    %1100 = vmatprep.subr.mxu0 0.0
    %1101 = vmatpush1.msra.mxu0 0.0
    %1102 = vmatprep.subr.mxu0 0.0
    %1103 = vmatpush1.msra.mxu0 0.0
    %1104 = vmatprep.mubr.f32.mxu0 0.0
    %1105 = vmatmul.mubr.f32.gmra.mrb[0].mxu0 %v961
    %v1106 = vpop.f32.mrb[0].mxu0
    %v1107 = vadd.f32 %v49, %v1106
    %v1108 = vpop.f32.mrb[0].mxu0
    %1109 = vdwg.mxu0
    %v1110 = vmul.f32 %v1039, %v1107
    %1112 = vrot.lane.b32.xlu0 %v1110, 64
    %v1113 = vpop.permute.xlu0 %1112
    %v1115 = vadd.f32 %v95, %v1113
    %v1116 = vtanh.pop %v1115
    %v1117 = vsub.f32 1.0, %v1039
    %1119 = vrot.lane.b32.xlu0 %v1116, 96
    %v1120 = vpop.permute.xlu0 %1119
    %v1122 = vmul.f32 %v1117, %v1120
    %v1123 = vmul.f32 %v1039, %v957
    %v1124 = vadd.f32 %v1122, %v1123
    %1126 = vrot.lane.b32.xlu0 %v1124, 96
    %v1127 = vpop.permute.xlu0 %1126
    %v1128 = vsel %vm108, %v1127, 0
    %1130 = vmatprep.subr.mxu0 0.0
    %1131 = vmatpush1.msra.mxu0 %v37
    %1132 = vmatprep.subr.mxu0 0.0
    %1133 = vmatpush1.msra.mxu0 %v38
    %1134 = vmatprep.subr.mxu0 0.0
    %1135 = vmatpush1.msra.mxu0 %v39
    %1136 = vmatprep.subr.mxu0 0.0
    %1137 = vmatpush1.msra.mxu0 %v40
    %1138 = vmatprep.subr.mxu0 0.0
    %1139 = vmatpush1.msra.mxu0 0.0
    %1140 = vmatprep.subr.mxu0 0.0
    %1141 = vmatpush1.msra.mxu0 0.0
    %1142 = vmatprep.subr.mxu0 0.0
    %1143 = vmatpush1.msra.mxu0 0.0
    %1144 = vmatprep.subr.mxu0 0.0
    %1145 = vmatpush1.msra.mxu0 0.0
    %1146 = vmatprep.subr.mxu0 0.0
    %1147 = vmatpush1.msra.mxu0 0.0
    %1148 = vmatprep.subr.mxu0 0.0
    %1149 = vmatpush1.msra.mxu0 0.0
    %1150 = vmatprep.subr.mxu0 0.0
    %1151 = vmatpush1.msra.mxu0 0.0
    %1152 = vmatprep.subr.mxu0 0.0
    %1153 = vmatpush1.msra.mxu0 0.0
    %1154 = vmatprep.subr.mxu0 0.0
    %1155 = vmatpush1.msra.mxu0 0.0
    %1156 = vmatprep.subr.mxu0 0.0
    %1157 = vmatpush1.msra.mxu0 0.0
    %1158 = vmatprep.subr.mxu0 0.0
    %1159 = vmatpush1.msra.mxu0 0.0
    %1160 = vmatprep.subr.mxu0 0.0
    %1161 = vmatpush1.msra.mxu0 0.0
    %1162 = vmatprep.subr.mxu0 0.0
    %1163 = vmatpush1.msra.mxu0 0.0
    %1164 = vmatprep.subr.mxu0 0.0
    %1165 = vmatpush1.msra.mxu0 0.0
    %1166 = vmatprep.subr.mxu0 0.0
    %1167 = vmatpush1.msra.mxu0 0.0
    %1168 = vmatprep.subr.mxu0 0.0
    %1169 = vmatpush1.msra.mxu0 0.0
    %1170 = vmatprep.subr.mxu0 0.0
    %1171 = vmatpush1.msra.mxu0 0.0
    %1172 = vmatprep.subr.mxu0 0.0
    %1173 = vmatpush1.msra.mxu0 0.0
    %1174 = vmatprep.subr.mxu0 0.0
    %1175 = vmatpush1.msra.mxu0 0.0
    %1176 = vmatprep.subr.mxu0 0.0
    %1177 = vmatpush1.msra.mxu0 0.0
    %1178 = vmatprep.subr.mxu0 0.0
    %1179 = vmatpush1.msra.mxu0 0.0
    %1180 = vmatprep.subr.mxu0 0.0
    %1181 = vmatpush1.msra.mxu0 0.0
    %1182 = vmatprep.subr.mxu0 0.0
    %1183 = vmatpush1.msra.mxu0 0.0
    %1184 = vmatprep.subr.mxu0 0.0
    %1185 = vmatpush1.msra.mxu0 0.0
    %1186 = vmatprep.subr.mxu0 0.0
    %1187 = vmatpush1.msra.mxu0 0.0
    %1188 = vmatprep.subr.mxu0 0.0
    %1189 = vmatpush1.msra.mxu0 0.0
    %1190 = vmatprep.subr.mxu0 0.0
    %1191 = vmatpush1.msra.mxu0 0.0
    %1192 = vmatprep.subr.mxu0 0.0
    %1193 = vmatpush1.msra.mxu0 0.0
    %1194 = vmatprep.mubr.f32.mxu0 0.0
    %1195 = vmatmul.mubr.f32.gmra.mrb[0].mxu0 %v1128
    %v1196 = vpop.f32.mrb[0].mxu0
    %v1197 = vadd.f32 0.0, %v1196
    %v1198 = vpop.f32.mrb[0].mxu0
    %1199 = vdwg.mxu0
    %v1200 = vadd.f32 %v101, %v1197
    %v1201 = vxor.u32 %v1200, 2147483648
    %v1202 = vmul.f32 %v1201, 1.442695
    %v1203 = vpow.pop %v1202
    %v1204 = vadd.f32 %v1203, 1.0
    %v1205 = vrcp.pop %v1204
    %v1206 = vmul.f32 1.0, %v1205
    %1207 = vmatprep.subr.mxu0 0.0
    %1208 = vmatpush1.msra.mxu0 %v194
    %1209 = vmatprep.subr.mxu0 0.0
    %1210 = vmatpush1.msra.mxu0 %v196
    %1211 = vmatprep.subr.mxu0 0.0
    %1212 = vmatpush1.msra.mxu0 %v198
    %1213 = vmatprep.subr.mxu0 0.0
    %1214 = vmatpush1.msra.mxu0 %v200
    %1215 = vmatprep.subr.mxu0 0.0
    %1216 = vmatpush1.msra.mxu0 0.0
    %1217 = vmatprep.subr.mxu0 0.0
    %1218 = vmatpush1.msra.mxu0 0.0
    %1219 = vmatprep.subr.mxu0 0.0
    %1220 = vmatpush1.msra.mxu0 0.0
    %1221 = vmatprep.subr.mxu0 0.0
    %1222 = vmatpush1.msra.mxu0 0.0
    %1223 = vmatprep.subr.mxu0 0.0
    %1224 = vmatpush1.msra.mxu0 0.0
    %1225 = vmatprep.subr.mxu0 0.0
    %1226 = vmatpush1.msra.mxu0 0.0
    %1227 = vmatprep.subr.mxu0 0.0
    %1228 = vmatpush1.msra.mxu0 0.0
    %1229 = vmatprep.subr.mxu0 0.0
    %1230 = vmatpush1.msra.mxu0 0.0
    %1231 = vmatprep.subr.mxu0 0.0
    %1232 = vmatpush1.msra.mxu0 0.0
    %1233 = vmatprep.subr.mxu0 0.0
    %1234 = vmatpush1.msra.mxu0 0.0
    %1235 = vmatprep.subr.mxu0 0.0
    %1236 = vmatpush1.msra.mxu0 0.0
    %1237 = vmatprep.subr.mxu0 0.0
    %1238 = vmatpush1.msra.mxu0 0.0
    %1239 = vmatprep.subr.mxu0 0.0
    %1240 = vmatpush1.msra.mxu0 0.0
    %1241 = vmatprep.subr.mxu0 0.0
    %1242 = vmatpush1.msra.mxu0 0.0
    %1243 = vmatprep.subr.mxu0 0.0
    %1244 = vmatpush1.msra.mxu0 0.0
    %1245 = vmatprep.subr.mxu0 0.0
    %1246 = vmatpush1.msra.mxu0 0.0
    %1247 = vmatprep.subr.mxu0 0.0
    %1248 = vmatpush1.msra.mxu0 0.0
    %1249 = vmatprep.subr.mxu0 0.0
    %1250 = vmatpush1.msra.mxu0 0.0
    %1251 = vmatprep.subr.mxu0 0.0
    %1252 = vmatpush1.msra.mxu0 0.0
    %1253 = vmatprep.subr.mxu0 0.0
    %1254 = vmatpush1.msra.mxu0 0.0
    %1255 = vmatprep.subr.mxu0 0.0
    %1256 = vmatpush1.msra.mxu0 0.0
    %1257 = vmatprep.subr.mxu0 0.0
    %1258 = vmatpush1.msra.mxu0 0.0
    %1259 = vmatprep.subr.mxu0 0.0
    %1260 = vmatpush1.msra.mxu0 0.0
    %1261 = vmatprep.subr.mxu0 0.0
    %1262 = vmatpush1.msra.mxu0 0.0
    %1263 = vmatprep.subr.mxu0 0.0
    %1264 = vmatpush1.msra.mxu0 0.0
    %1265 = vmatprep.subr.mxu0 0.0
    %1266 = vmatpush1.msra.mxu0 0.0
    %1267 = vmatprep.subr.mxu0 0.0
    %1268 = vmatpush1.msra.mxu0 0.0
    %1269 = vmatprep.subr.mxu0 0.0
    %1270 = vmatpush1.msra.mxu0 0.0
    %1271 = vmatprep.mubr.f32.mxu0 0.0
    %1272 = vmatmul.mubr.f32.gmra.mrb[0].mxu0 %v1128
    %v1273 = vpop.f32.mrb[0].mxu0
    %v1274 = vadd.f32 %v49, %v1273
    %v1275 = vpop.f32.mrb[0].mxu0
    %1276 = vdwg.mxu0
    %v1277 = vmul.f32 %v1206, %v1274
    %1279 = vrot.lane.b32.xlu0 %v1277, 64
    %v1280 = vpop.permute.xlu0 %1279
    %v1282 = vadd.f32 %v101, %v1280
    %v1283 = vtanh.pop %v1282
    %v1284 = vsub.f32 1.0, %v1206
    %1286 = vrot.lane.b32.xlu0 %v1283, 96
    %v1287 = vpop.permute.xlu0 %1286
    %v1289 = vmul.f32 %v1284, %v1287
    %v1290 = vmul.f32 %v1206, %v1124
    %v1291 = vadd.f32 %v1289, %v1290
    %1293 = vrot.lane.b32.xlu0 %v1291, 96
    %v1294 = vpop.permute.xlu0 %1293
    %v1295 = vsel %vm108, %v1294, 0
    %1297 = vmatprep.subr.mxu0 0.0
    %1298 = vmatpush1.msra.mxu0 %v37
    %1299 = vmatprep.subr.mxu0 0.0
    %1300 = vmatpush1.msra.mxu0 %v38
    %1301 = vmatprep.subr.mxu0 0.0
    %1302 = vmatpush1.msra.mxu0 %v39
    %1303 = vmatprep.subr.mxu0 0.0
    %1304 = vmatpush1.msra.mxu0 %v40
    %1305 = vmatprep.subr.mxu0 0.0
    %1306 = vmatpush1.msra.mxu0 0.0
    %1307 = vmatprep.subr.mxu0 0.0
    %1308 = vmatpush1.msra.mxu0 0.0
    %1309 = vmatprep.subr.mxu0 0.0
    %1310 = vmatpush1.msra.mxu0 0.0
    %1311 = vmatprep.subr.mxu0 0.0
    %1312 = vmatpush1.msra.mxu0 0.0
    %1313 = vmatprep.subr.mxu0 0.0
    %1314 = vmatpush1.msra.mxu0 0.0
    %1315 = vmatprep.subr.mxu0 0.0
    %1316 = vmatpush1.msra.mxu0 0.0
    %1317 = vmatprep.subr.mxu0 0.0
    %1318 = vmatpush1.msra.mxu0 0.0
    %1319 = vmatprep.subr.mxu0 0.0
    %1320 = vmatpush1.msra.mxu0 0.0
    %1321 = vmatprep.subr.mxu0 0.0
    %1322 = vmatpush1.msra.mxu0 0.0
    %1323 = vmatprep.subr.mxu0 0.0
    %1324 = vmatpush1.msra.mxu0 0.0
    %1325 = vmatprep.subr.mxu0 0.0
    %1326 = vmatpush1.msra.mxu0 0.0
    %1327 = vmatprep.subr.mxu0 0.0
    %1328 = vmatpush1.msra.mxu0 0.0
    %1329 = vmatprep.subr.mxu0 0.0
    %1330 = vmatpush1.msra.mxu0 0.0
    %1331 = vmatprep.subr.mxu0 0.0
    %1332 = vmatpush1.msra.mxu0 0.0
    %1333 = vmatprep.subr.mxu0 0.0
    %1334 = vmatpush1.msra.mxu0 0.0
    %1335 = vmatprep.subr.mxu0 0.0
    %1336 = vmatpush1.msra.mxu0 0.0
    %1337 = vmatprep.subr.mxu0 0.0
    %1338 = vmatpush1.msra.mxu0 0.0
    %1339 = vmatprep.subr.mxu0 0.0
    %1340 = vmatpush1.msra.mxu0 0.0
    %1341 = vmatprep.subr.mxu0 0.0
    %1342 = vmatpush1.msra.mxu0 0.0
    %1343 = vmatprep.subr.mxu0 0.0
    %1344 = vmatpush1.msra.mxu0 0.0
    %1345 = vmatprep.subr.mxu0 0.0
    %1346 = vmatpush1.msra.mxu0 0.0
    %1347 = vmatprep.subr.mxu0 0.0
    %1348 = vmatpush1.msra.mxu0 0.0
    %1349 = vmatprep.subr.mxu0 0.0
    %1350 = vmatpush1.msra.mxu0 0.0
    %1351 = vmatprep.subr.mxu0 0.0
    %1352 = vmatpush1.msra.mxu0 0.0
    %1353 = vmatprep.subr.mxu0 0.0
    %1354 = vmatpush1.msra.mxu0 0.0
    %1355 = vmatprep.subr.mxu0 0.0
    %1356 = vmatpush1.msra.mxu0 0.0
    %1357 = vmatprep.subr.mxu0 0.0
    %1358 = vmatpush1.msra.mxu0 0.0
    %1359 = vmatprep.subr.mxu0 0.0
    %1360 = vmatpush1.msra.mxu0 0.0
    %1361 = vmatprep.mubr.f32.mxu0 0.0
    %1362 = vmatmul.mubr.f32.gmra.mrb[0].mxu0 %v1295
    %v1363 = vpop.f32.mrb[0].mxu0
    %v1364 = vadd.f32 0.0, %v1363
    %v1365 = vpop.f32.mrb[0].mxu0
    %1366 = vdwg.mxu0
    %v1367 = vadd.f32 %v107, %v1364
    %v1368 = vxor.u32 %v1367, 2147483648
    %v1369 = vmul.f32 %v1368, 1.442695
    %v1370 = vpow.pop %v1369
    %v1371 = vadd.f32 %v1370, 1.0
    %v1372 = vrcp.pop %v1371
    %v1373 = vmul.f32 1.0, %v1372
    %1374 = vmatprep.subr.mxu0 0.0
    %1375 = vmatpush1.msra.mxu0 %v194
    %1376 = vmatprep.subr.mxu0 0.0
    %1377 = vmatpush1.msra.mxu0 %v196
    %1378 = vmatprep.subr.mxu0 0.0
    %1379 = vmatpush1.msra.mxu0 %v198
    %1380 = vmatprep.subr.mxu0 0.0
    %1381 = vmatpush1.msra.mxu0 %v200
    %1382 = vmatprep.subr.mxu0 0.0
    %1383 = vmatpush1.msra.mxu0 0.0
    %1384 = vmatprep.subr.mxu0 0.0
    %1385 = vmatpush1.msra.mxu0 0.0
    %1386 = vmatprep.subr.mxu0 0.0
    %1387 = vmatpush1.msra.mxu0 0.0
    %1388 = vmatprep.subr.mxu0 0.0
    %1389 = vmatpush1.msra.mxu0 0.0
    %1390 = vmatprep.subr.mxu0 0.0
    %1391 = vmatpush1.msra.mxu0 0.0
    %1392 = vmatprep.subr.mxu0 0.0
    %1393 = vmatpush1.msra.mxu0 0.0
    %1394 = vmatprep.subr.mxu0 0.0
    %1395 = vmatpush1.msra.mxu0 0.0
    %1396 = vmatprep.subr.mxu0 0.0
    %1397 = vmatpush1.msra.mxu0 0.0
    %1398 = vmatprep.subr.mxu0 0.0
    %1399 = vmatpush1.msra.mxu0 0.0
    %1400 = vmatprep.subr.mxu0 0.0
    %1401 = vmatpush1.msra.mxu0 0.0
    %1402 = vmatprep.subr.mxu0 0.0
    %1403 = vmatpush1.msra.mxu0 0.0
    %1404 = vmatprep.subr.mxu0 0.0
    %1405 = vmatpush1.msra.mxu0 0.0
    %1406 = vmatprep.subr.mxu0 0.0
    %1407 = vmatpush1.msra.mxu0 0.0
    %1408 = vmatprep.subr.mxu0 0.0
    %1409 = vmatpush1.msra.mxu0 0.0
    %1410 = vmatprep.subr.mxu0 0.0
    %1411 = vmatpush1.msra.mxu0 0.0
    %1412 = vmatprep.subr.mxu0 0.0
    %1413 = vmatpush1.msra.mxu0 0.0
    %1414 = vmatprep.subr.mxu0 0.0
    %1415 = vmatpush1.msra.mxu0 0.0
    %1416 = vmatprep.subr.mxu0 0.0
    %1417 = vmatpush1.msra.mxu0 0.0
    %1418 = vmatprep.subr.mxu0 0.0
    %1419 = vmatpush1.msra.mxu0 0.0
    %1420 = vmatprep.subr.mxu0 0.0
    %1421 = vmatpush1.msra.mxu0 0.0
    %1422 = vmatprep.subr.mxu0 0.0
    %1423 = vmatpush1.msra.mxu0 0.0
    %1424 = vmatprep.subr.mxu0 0.0
    %1425 = vmatpush1.msra.mxu0 0.0
    %1426 = vmatprep.subr.mxu0 0.0
    %1427 = vmatpush1.msra.mxu0 0.0
    %1428 = vmatprep.subr.mxu0 0.0
    %1429 = vmatpush1.msra.mxu0 0.0
    %1430 = vmatprep.subr.mxu0 0.0
    %1431 = vmatpush1.msra.mxu0 0.0
    %1432 = vmatprep.subr.mxu0 0.0
    %1433 = vmatpush1.msra.mxu0 0.0
    %1434 = vmatprep.subr.mxu0 0.0
    %1435 = vmatpush1.msra.mxu0 0.0
    %1436 = vmatprep.subr.mxu0 0.0
    %1437 = vmatpush1.msra.mxu0 0.0
    %1438 = vmatprep.mubr.f32.mxu0 0.0
    %1439 = vmatmul.mubr.f32.gmra.mrb[0].mxu0 %v1295
    %v1440 = vpop.f32.mrb[0].mxu0
    %v1441 = vadd.f32 %v49, %v1440
    %v1442 = vpop.f32.mrb[0].mxu0
    %1443 = vdwg.mxu0
    %v1444 = vmul.f32 %v1373, %v1441
    %1446 = vrot.lane.b32.xlu0 %v1444, 64
    %v1447 = vpop.permute.xlu0 %1446
    %v1449 = vadd.f32 %v107, %v1447
    %v1450 = vtanh.pop %v1449
    %v1451 = vsub.f32 1.0, %v1373
    %1453 = vrot.lane.b32.xlu0 %v1450, 96
    %v1454 = vpop.permute.xlu0 %1453
    %v1456 = vmul.f32 %v1451, %v1454
    %v1457 = vmul.f32 %v1373, %v1291
    %v1458 = vadd.f32 %v1456, %v1457
    %v1459 = vlaneseq
    %v1460 = vshrl.u32 %v1459, 7
    %v1461 = vsub.s32 0, %v1460
    %v1462 = vrot.slane %v44, %v1461
    %1464 = vrot.lane.b32.xlu0 %v1462, 32
    %v1465 = vpop.permute.xlu0 %1464
    %v1467 = vmul.f32 %v1458, %v1465
    %1469 = vrot.lane.b32.xlu0 %v1467, 96
    %v1470 = vpop.permute.xlu0 %1469
    %v1472 = vsel %vm108, %v1470, 0.0
    %1473 = vadd.xlane.f32.xlu0 %v1472
    %v1474 = vpop.xlane.xlu0 %1473
    %v1475 = vlaneseq
    %v1476 = vshrl.u32 %v1475, 7
    %v1477 = vsub.s32 0, %v1476
    %v1478 = vrot.slane %v45, %v1477
    %v1479 = vadd.f32 %v1474, %v1478
    %vm1480 = vcmask 7168
    %1481 = vst.msk [vmem:[%s2] sm:$0xff] %vm1480, %v1479
    // Predicated region
    $region18: #{gru_predictor_forward.1} parent=1 // pred_check
      _
    $region19: #{gru_predictor_forward.1} parent=1 // pred_check_branch
      %1483 = sbr.rel (0) target = $region21
    $region20: #{gru_predictor_forward.1} parent=1 // pred_region
      _
    $region21: #{gru_predictor_forward.1} parent=1 // pred_fallthru
      _
    // Predicated region
    $region22: #{gru_predictor_forward.1} parent=1 // pred_check
      _
    $region23: #{gru_predictor_forward.1} parent=1 // pred_check_branch
      %1485 = sbr.rel (0) target = $region25
    $region24: #{gru_predictor_forward.1} parent=1 // pred_region
      _
    $region25: #{gru_predictor_forward.1} parent=1 // pred_fallthru
      _
    %1486 = vsyncpa [#allocation3], 1
    %1487 = vsyncpa [#allocation5], 1

</llo_original>
